<compile_context>
chip_gen: v7x
topology: tpu7x:2x2x1
jax: 0.10.0
libtpu: 0.0.40
codegen_flags: <defaults>
</compile_context>

<pallas_src>
import functools

import jax
import jax.numpy as jnp
from jax import lax
from jax.experimental import pallas as pl
from jax.experimental.pallas import tpu as pltpu

_EPS = 1e-8
_LANE = 128
_SUBLANE = 8


# ----------------------------------------------------------------------------
# Small helpers.
# ----------------------------------------------------------------------------
def _round_up(x, m):
    return ((x + m - 1) // m) * m


def _const_spec(shape):
    """BlockSpec for a grid-constant operand (same block at every grid step).

    Single-buffer it (pl.Buffered(1)) to save VMEM — important on v7x's 64 MiB —
    falling back to the default double-buffered spec if this JAX build does not
    accept the pipeline_mode kwarg.
    """
    index_map = lambda *_: (0,) * len(shape)
    try:
        return pl.BlockSpec(shape, index_map, pipeline_mode=pl.Buffered(1))
    except (TypeError, AttributeError):
        return pl.BlockSpec(shape, index_map)


def _choose_block_m(m, rq_pad, block_m):
    """Queries per grid step: target >=256 LHS rows (fills the 256-wide MXU on
    v6e/v7x) but keep >=2 grid steps for v7x megacore when the batch allows."""
    tm = block_m if block_m is not None else pl.cdiv(256, rq_pad)
    tm = max(_SUBLANE, _round_up(tm, _SUBLANE))      # mult of 8 -> aligned 2-D stores
    while tm > _SUBLANE and (m + tm - 1) // tm < 2 and m > _SUBLANE:
        tm -= _SUBLANE
    return tm


def _vmem_limit(block_bytes):
    """Explicit scoped-VMEM budget: 2x the live blocks, clamped to [32, 64] MiB
    (64 MiB = v7x physical VMEM; v5e's 16 MiB scoped default is too small)."""
    need = 2 * int(sum(block_bytes))
    return int(min(max(need, 32 * 1024 * 1024), 64 * 1024 * 1024))


def _channel_mask(c_pad, c_true):
    return (lax.broadcasted_iota(jnp.int32, (1, c_pad), 1) < c_true).astype(jnp.float32)


def _store_lane_padded(ref, value):
    """One-time prep stores: full-width when already lane dense, otherwise
    zero-fill + sliced store (masked, but only in the run-once prep kernel)."""
    cols = value.shape[-1]
    if cols == ref.shape[-1]:
        ref[...] = value.astype(ref.dtype)
    else:
        ref[...] = jnp.zeros_like(ref)
        ref[:, :cols] = value.astype(ref.dtype)


# ----------------------------------------------------------------------------
# Kernel 1: one-time prep (proto side + hoisted weight_2 for the whole batch).
#   proto: [N, Rp_pad, C_pad]   query: [M_pad, Rq_pad, C_pad]   (zero padded)
# Outputs (pre-transposed so every per-tile matmul is in MXU orientation):
#   pool_t   [C_pad, N_lane]    bf16  mean over proto nodes  (-> weight_1 RHS)
#   scaled_t [C_pad, NRp_lane]  bf16  centered proto * 1/max(||.||, eps)
#   weight_2 [M_pad, NRp_lane]  f32   relu(proto_node . mean_pool(query)) + 1e-3
# ----------------------------------------------------------------------------
def _prep_kernel(p_ref, q_ref, pool_t_ref, scaled_t_ref, w2_ref, *,
                 c_true, rp_true, rq_true, center):
    n, rp_pad, c_pad = p_ref.shape
    nrp = n * rp_pad

    p = p_ref[...]                                             # [N, Rp_pad, C_pad] f32
    p2d = p.reshape(nrp, c_pad)                                # aligned view (Rp_pad % 8 == 0)

    # F.adaptive_avg_pool2d(proto, [1, 1]) over the real nodes -> [C_pad, N]
    pool_t = (jnp.sum(p, axis=1) * jnp.float32(1.0 / rp_true)).T
    _store_lane_padded(pool_t_ref, pool_t)

    # get_weight_vector(proto, query): hoisted out of the per-tile loop.
    q = q_ref[...]                                             # [M_pad, Rq_pad, C_pad] f32
    q_pool = jnp.sum(q, axis=1) * jnp.float32(1.0 / rq_true)   # [M_pad, C_pad]
    w2 = jnp.dot(q_pool.astype(jnp.bfloat16), p2d.astype(jnp.bfloat16).T,
                 preferred_element_type=jnp.float32)           # [M_pad, N*Rp_pad]
    _store_lane_padded(w2_ref, jnp.maximum(w2, 0.0) + 0.001)

    # normalize_feature('center') and fold 1/max(||.||, eps) into the proto side.
    if center:
        pmean = jnp.sum(p2d, axis=-1, keepdims=True) * jnp.float32(1.0 / c_true)
        if c_pad != c_true:
            pc = p2d - pmean * _channel_mask(c_pad, c_true)    # keep pad channels at 0
        else:
            pc = p2d - pmean
    else:
        pc = p2d
    pnorm = jnp.sqrt(jnp.sum(pc * pc, axis=-1, keepdims=True))
    inv_p = pl.reciprocal(jnp.maximum(pnorm, jnp.float32(_EPS)), approx=True)
    _store_lane_padded(scaled_t_ref, (pc * inv_p).astype(jnp.bfloat16).T)


# ----------------------------------------------------------------------------
# Kernel 2 (fused, per tile of TM queries):
#   weight_1 tile [TM, Rq_pad, N_lane]  f32
#   sim tile      [TM, Rq_pad, NRp_lane] bf16 (centered cosine similarity)
#   logits tile   [TM, N_lane]          f32  (temperature-scaled sum; EMD flow omitted)
# ----------------------------------------------------------------------------
def _emd_tile_kernel(q_ref, pool_t_ref, scaled_t_ref, seg_ref,
                     sim_ref, w1_ref, logit_ref, *, temperature, center, c_true):
    tm, rq_pad, c_pad = q_ref.shape
    n_lane = pool_t_ref.shape[1]
    nrp_lane = scaled_t_ref.shape[1]

    q2d = q_ref[...].reshape(tm * rq_pad, c_pad)               # f32, aligned view

    # --- get_weight_vector(query, proto): relu(q . mean_pool(proto)) + 1e-3 ---
    w1 = jnp.dot(q2d.astype(jnp.bfloat16), pool_t_ref[...],
                 preferred_element_type=jnp.float32)           # [TM*Rq, N_lane]
    w1_ref[...] = (jnp.maximum(w1, 0.0) + 0.001).reshape(tm, rq_pad, n_lane)

    # --- normalize_feature('center') on the query side + cosine similarity ---
    if center:
        qmean = jnp.sum(q2d, axis=-1, keepdims=True) * jnp.float32(1.0 / c_true)
        if c_pad != c_true:
            qc = q2d - qmean * _channel_mask(c_pad, c_true)    # keep pad channels at 0
        else:
            qc = q2d - qmean
    else:
        qc = q2d
    qnorm = jnp.sqrt(jnp.sum(qc * qc, axis=-1, keepdims=True))
    inv_q = pl.reciprocal(jnp.maximum(qnorm, jnp.float32(_EPS)), approx=True)

    # bf16 MXU operands, f32 accumulation. Proto side already 1/||p|| scaled.
    dots = jnp.dot(qc.astype(jnp.bfloat16), scaled_t_ref[...],
                   preferred_element_type=jnp.float32)         # [TM*Rq, NRp_lane]
    sim = (dots * inv_q).reshape(tm, rq_pad, nrp_lane)
    sim_ref[...] = sim.astype(sim_ref.dtype)                   # bf16 HBM writeback

    # --- (flow-less) get_emd_distance: per-proto segment sum on the MXU ------
    # TODO(synk): emd_inference_opencv's LP flow would re-weight `sim` here.
    s = jnp.sum(sim, axis=1)                                   # [TM, NRp_lane]
    logit_ref[...] = (jnp.dot(s.astype(jnp.bfloat16), seg_ref[...],
                              preferred_element_type=jnp.float32)
                      * jnp.float32(temperature))


# ----------------------------------------------------------------------------
# Glue mirroring DeepEMD.emd_forward (query tiled over a parallel grid).
# ----------------------------------------------------------------------------
def emd_forward(proto_nchw, query_nchw, *, temperature, norm="center", block_m=None):
    """proto/query: [B, C, H, W] NCHW feature maps (encoder outputs)."""
    n, c, hp, wp = proto_nchw.shape
    m, _, hq, wq = query_nchw.shape
    rp, rq = hp * wp, hq * wq

    c_pad = _round_up(c, _LANE)
    rp_pad = _round_up(rp, _SUBLANE)
    rq_pad = _round_up(rq, _SUBLANE)
    n_lane = _round_up(n, _LANE)
    nrp = n * rp_pad
    nrp_lane = _round_up(nrp, _LANE)

    tm = _choose_block_m(m, rq_pad, block_m)
    m_pad = _round_up(m, tm)

    # NCHW -> (B, node, channel): channels on the TPU lane axis.  Zero padding is
    # numerically inert and makes every in-kernel reshape an aligned view.
    proto = jnp.transpose(proto_nchw.reshape(n, c, rp), (0, 2, 1)).astype(jnp.float32)
    query = jnp.transpose(query_nchw.reshape(m, c, rq), (0, 2, 1)).astype(jnp.float32)
    proto = jnp.pad(proto, ((0, 0), (0, rp_pad - rp), (0, c_pad - c)))
    query = jnp.pad(query, ((0, m_pad - m), (0, rq_pad - rq), (0, c_pad - c)))

    center = (norm == "center")

    # ----- one-time proto prep + hoisted weight_2 (whole query batch) --------
    prep_vlim = _vmem_limit([
        n * rp_pad * c_pad * 4, m_pad * rq_pad * c_pad * 4,
        c_pad * n_lane * 2, c_pad * nrp_lane * 2, m_pad * nrp_lane * 4,
    ])
    pool_t, scaled_t, w2_nat = pl.pallas_call(
        functools.partial(_prep_kernel, c_true=c, rp_true=rp, rq_true=rq, center=center),
        out_shape=(
            jax.ShapeDtypeStruct((c_pad, n_lane), jnp.bfloat16),
            jax.ShapeDtypeStruct((c_pad, nrp_lane), jnp.bfloat16),
            jax.ShapeDtypeStruct((m_pad, nrp_lane), jnp.float32),
        ),
        grid=(1,),
        in_specs=[pl.BlockSpec((n, rp_pad, c_pad), lambda i: (0, 0, 0)),
                  pl.BlockSpec((m_pad, rq_pad, c_pad), lambda i: (0, 0, 0))],
        out_specs=(pl.BlockSpec((c_pad, n_lane), lambda i: (0, 0)),
                   pl.BlockSpec((c_pad, nrp_lane), lambda i: (0, 0)),
                   pl.BlockSpec((m_pad, nrp_lane), lambda i: (0, 0))),
        compiler_params=pltpu.CompilerParams(
            dimension_semantics=("arbitrary",), vmem_limit_bytes=prep_vlim),
    )(proto, query)

    # Block-indicator for the per-proto segment sum (rides the otherwise-idle MXU).
    seg = (jnp.arange(nrp_lane)[:, None] // rp_pad
           == jnp.arange(n_lane)[None, :]).astype(jnp.bfloat16)

    temp = float(temperature) / float(rq)            # num_node = weight_1.shape[-1]

    vlim = _vmem_limit([
        tm * rq_pad * c_pad * 4,                     # query tile (f32)
        c_pad * n_lane * 2,                          # pool_t (bf16, constant)
        c_pad * nrp_lane * 2,                        # scaled_t (bf16, constant)
        nrp_lane * n_lane * 2,                       # seg (bf16, constant)
        tm * rq_pad * nrp_lane * (2 + 4),            # sim tile (bf16 out + f32 live)
        tm * rq_pad * n_lane * 4,                    # w1 tile
        tm * n_lane * 4,                             # logit tile
    ])

    kernel = functools.partial(_emd_tile_kernel, temperature=temp, center=center, c_true=c)
    sim_nat, w1_nat, logit_nat = pl.pallas_call(
        kernel,
        out_shape=(
            jax.ShapeDtypeStruct((m_pad, rq_pad, nrp_lane), jnp.bfloat16),
            jax.ShapeDtypeStruct((m_pad, rq_pad, n_lane), jnp.float32),
            jax.ShapeDtypeStruct((m_pad, n_lane), jnp.float32),
        ),
        grid=(m_pad // tm,),
        in_specs=[
            pl.BlockSpec((tm, rq_pad, c_pad), lambda i: (i, 0, 0)),
            _const_spec((c_pad, n_lane)),
            _const_spec((c_pad, nrp_lane)),
            _const_spec((nrp_lane, n_lane)),
        ],
        out_specs=(
            pl.BlockSpec((tm, rq_pad, nrp_lane), lambda i: (i, 0, 0)),
            pl.BlockSpec((tm, rq_pad, n_lane), lambda i: (i, 0, 0)),
            pl.BlockSpec((tm, n_lane), lambda i: (i, 0)),
        ),
        compiler_params=pltpu.CompilerParams(
            dimension_semantics=("parallel",), vmem_limit_bytes=vlim),
    )(query, pool_t, scaled_t, seg)

    # Layout plumbing back to the PyTorch conventions (sim transpose stays bf16).
    sim = sim_nat[:m, :rq, :nrp].reshape(m, rq, n, rp_pad)[..., :rp]
    sim = jnp.transpose(sim, (0, 2, 1, 3)).astype(jnp.float32)          # [M, N, Rq, Rp]
    weight_1 = jnp.transpose(w1_nat[:m, :rq, :n], (0, 2, 1))            # [M, N, Rq]
    weight_2 = jnp.transpose(
        w2_nat[:m, :nrp].reshape(m, n, rp_pad)[..., :rp], (1, 0, 2))    # [N, M, Rp]
    logits = logit_nat[:m, :n]                                          # [M, N]
    return logits, (sim, weight_1, weight_2)


# ----------------------------------------------------------------------------
# Kernel 3: classifier = Flatten (AdaptiveAvgPool2d((1,1)) + reshape) + Linear.
# C and K padded to lane-dense 128 multiples; bf16 MXU operands, f32 accumulate.
# ----------------------------------------------------------------------------
def _classifier_kernel(feat_ref, w_ref, b_ref, out_ref):
    pooled = jnp.mean(feat_ref[...], axis=1)                            # [B, C_pad] f32
    out_ref[...] = jnp.dot(pooled.astype(jnp.bfloat16), w_ref[...],
                           preferred_element_type=jnp.float32) + b_ref[...]


def classifier(feat_nchw, w, b):
    bsz, c, h, wsp = feat_nchw.shape
    r = h * wsp
    k = w.shape[0]
    c_pad = _round_up(c, _LANE)
    k_pad = _round_up(k, _LANE)
    feat = jnp.transpose(feat_nchw.reshape(bsz, c, r), (0, 2, 1)).astype(jnp.float32)
    feat = jnp.pad(feat, ((0, 0), (0, 0), (0, c_pad - c)))
    w_t = jnp.pad(w.T.astype(jnp.float32),
                  ((0, c_pad - c), (0, k_pad - k))).astype(jnp.bfloat16)
    b2d = jnp.pad(b.astype(jnp.float32).reshape(1, k), ((0, 0), (0, k_pad - k)))
    out = pl.pallas_call(
        _classifier_kernel,
        out_shape=jax.ShapeDtypeStruct((bsz, k_pad), jnp.float32),
        grid=(1,),
        in_specs=[pl.BlockSpec((bsz, r, c_pad), lambda i: (0, 0, 0)),
                  pl.BlockSpec((c_pad, k_pad), lambda i: (0, 0)),
                  pl.BlockSpec((1, k_pad), lambda i: (0, 0))],
        out_specs=pl.BlockSpec((bsz, k_pad), lambda i: (0, 0)),
    )(feat, w_t, b2d)
    return out[:, :k]


# ----------------------------------------------------------------------------
# Mirrors DeepEMD.forward (training branch) given precomputed encoder features.
# ----------------------------------------------------------------------------
def deepemd_forward(feat1_l, feat2_l, feat_last, cls_w, cls_b, target, *,
                    temperature, block_m=None):
    # emd_logits.append(self.emd_forward(feature_list2[l], feature_list1[l]))
    emd_logit, aux = emd_forward(feat2_l, feat1_l, temperature=temperature,
                                 block_m=block_m)
    logits1 = classifier(feat_last, cls_w, cls_b)
    return logits1, [emd_logit], target, aux


# ----------------------------------------------------------------------------
# Pure-JAX reference (mirrors the PyTorch math) for a numerical sanity check.
# ----------------------------------------------------------------------------
def _ref_forward(feat1_l, feat2_l, feat_last, cls_w, cls_b, temperature):
    hi = jax.lax.Precision.HIGHEST
    proto, query = feat2_l, feat1_l
    n, c, hp, wp = proto.shape
    m = query.shape[0]
    rp = hp * wp
    rq = query.shape[2] * query.shape[3]
    p = proto.reshape(n, c, rp)
    q = query.reshape(m, c, rq)

    def weight_vec(a, b):
        bp = b.mean(-1)                                            # [Nb, C]
        comb = jnp.einsum("mcr,nc->mnr", a, bp, precision=hi)
        return jnp.maximum(comb, 0.0) + 0.001

    w1 = weight_vec(q, p)                                          # [M, N, Rq]
    w2 = weight_vec(p, q)                                          # [N, M, Rp]

    qc = q - q.mean(1, keepdims=True)
    pc = p - p.mean(1, keepdims=True)
    qn = jnp.sqrt((qc ** 2).sum(1))                                # [M, Rq]
    pn = jnp.sqrt((pc ** 2).sum(1))                                # [N, Rp]
    dots = jnp.einsum("mcq,ncp->mnqp", qc, pc, precision=hi)
    denom = (jnp.maximum(qn, _EPS)[:, None, :, None]
             * jnp.maximum(pn, _EPS)[None, :, None, :])
    sim = dots / denom
    emd_logits = sim.sum((-1, -2)) * (temperature / rq)

    pooled = feat_last.reshape(feat_last.shape[0], feat_last.shape[1], -1).mean(-1)
    cls_logits = jnp.dot(pooled, cls_w.T, precision=hi) + cls_b
    return cls_logits, emd_logits, sim, w1, w2


if __name__ == "__main__":
    key = jax.random.PRNGKey(0)
    k1, k2, k3, k4, k5 = jax.random.split(key, 5)

    # Small synthetic shapes consistent with the module's forward:
    B, C, H, W = 16, 64, 4, 4        # EMD feature map (R = 16 nodes per image)
    C_last = 64                      # channels of the last feature map (classifier input)
    num_classes = 6
    temperature = 12.5

    feat1 = jax.random.normal(k1, (B, C, H, W), jnp.float32)        # feature_list1[layer]
    feat2 = jax.random.normal(k2, (B, C, H, W), jnp.float32)        # feature_list2[layer]
    feat_last = jax.random.normal(k3, (B, C_last, H, W), jnp.float32)
    cls_w = jax.random.normal(k4, (num_classes, C_last), jnp.float32) * 0.1
    cls_b = jax.random.normal(k5, (num_classes,), jnp.float32) * 0.01
    target = jnp.arange(B, dtype=jnp.int32)

    # block_m=None -> auto: TM*Rq targets >=256 MXU rows but keeps >=2 grid
    # steps (here TM=8 -> a 2-step parallel grid).
    logits1, emd_logits, tgt, aux = deepemd_forward(
        feat1, feat2, feat_last, cls_w, cls_b, target,
        temperature=temperature, block_m=None,
    )
    jax.block_until_ready((logits1, emd_logits, tgt, aux))

    sim, weight_1, weight_2 = aux
    assert logits1.shape == (B, num_classes)
    assert emd_logits[0].shape == (B, B)
    assert sim.shape == (B, B, H * W, H * W)
    assert weight_1.shape == (B, B, H * W)
    assert weight_2.shape == (B, B, H * W)

    # Numerical sanity check vs. pure-JAX reference (loose tolerances account
    # for bf16 MXU operands, bf16 sim writeback + approx reciprocals).
    r_cls, r_emd, r_sim, r_w1, r_w2 = _ref_forward(
        feat1, feat2, feat_last, cls_w, cls_b, temperature)
    assert jnp.allclose(logits1, r_cls, rtol=5e-2, atol=5e-2)
    assert jnp.allclose(weight_1, r_w1, rtol=5e-2, atol=1e-1)
    assert jnp.allclose(weight_2, r_w2, rtol=5e-2, atol=1e-1)
    assert jnp.allclose(sim, r_sim, atol=5e-2)
    assert jnp.allclose(emd_logits[0], r_emd, rtol=5e-2, atol=5e-1)

    print("KERNEL_OK")
</pallas_src>

<mosaic_0001>
module attributes {stable_mosaic.version = 11 : i64} {
  func.func @_prep_kernel(%arg0: i32, %arg1: memref<16x16x128xf32, #tpu.memory_space<vmem>>, %arg2: memref<16x16x128xf32, #tpu.memory_space<vmem>>, %arg3: memref<128x128xbf16, #tpu.memory_space<vmem>>, %arg4: memref<128x256xbf16, #tpu.memory_space<vmem>>, %arg5: memref<16x256xf32, #tpu.memory_space<vmem>>) attributes {dimension_semantics = [#tpu.dimension_semantics<arbitrary>], iteration_bounds = array<i64: 1>, scalar_prefetch = 0 : i64, scratch_operands = 0 : i64, tpu.core_type = #tpu.core_type<tc>, window_params = [{pipeline_mode = #tpu.pipeline_mode<synchronous>, transform_indices = @transform_0, window_bounds = array<i64: 16, 16, 128>}, {pipeline_mode = #tpu.pipeline_mode<synchronous>, transform_indices = @transform_1, window_bounds = array<i64: 16, 16, 128>}, {pipeline_mode = #tpu.pipeline_mode<synchronous>, transform_indices = @transform_2, window_bounds = array<i64: 128, 128>}, {pipeline_mode = #tpu.pipeline_mode<synchronous>, transform_indices = @transform_3, window_bounds = array<i64: 128, 256>}, {pipeline_mode = #tpu.pipeline_mode<synchronous>, transform_indices = @transform_4, window_bounds = array<i64: 16, 256>}]} {
    %c0 = arith.constant 0 : index
    %c0_0 = arith.constant 0 : index
    %c0_1 = arith.constant 0 : index
    %0 = vector.load %arg1[%c0, %c0_0, %c0_1] : memref<16x16x128xf32, #tpu.memory_space<vmem>>, vector<16x16x128xf32>
    %1 = vector.shape_cast %0 : vector<16x16x128xf32> to vector<256x128xf32>
    %cst = arith.constant dense<0.000000e+00> : vector<16x128xf32>
    %2 = vector.multi_reduction <add>, %0, %cst [1] : vector<16x16x128xf32> to vector<16x128xf32>
    %cst_2 = arith.constant 6.250000e-02 : f32
    %3 = vector.broadcast %cst_2 : f32 to vector<16x128xf32>
    %4 = arith.mulf %2, %3 : vector<16x128xf32>
    %5 = tpu.transpose %4, [1, 0] : vector<16x128xf32> -> vector<128x16xf32>
    %cst_3 = arith.constant 0.000000e+00 : bf16
    %6 = vector.broadcast %cst_3 : bf16 to vector<128x128xbf16>
    %c0_4 = arith.constant 0 : index
    %c0_5 = arith.constant 0 : index
    %7 = vector.load %arg3[%c0_4, %c0_5] : memref<128x128xbf16, #tpu.memory_space<vmem>>, vector<128x128xbf16>
    tpu.vector_store %arg3[%c0_4, %c0_5], %6 {strides = array<i32>} : memref<128x128xbf16, #tpu.memory_space<vmem>>, vector<128x128xbf16>,
    %8 = arith.truncf %5 : vector<128x16xf32> to vector<128x16xbf16>
    %c0_6 = arith.constant 0 : index
    %c0_7 = arith.constant 0 : index
    %9 = vector.load %arg3[%c0_6, %c0_7] : memref<128x128xbf16, #tpu.memory_space<vmem>>, vector<128x16xbf16>
    tpu.vector_store %arg3[%c0_6, %c0_7], %8 {strides = array<i32>} : memref<128x128xbf16, #tpu.memory_space<vmem>>, vector<128x16xbf16>,
    %c0_8 = arith.constant 0 : index
    %c0_9 = arith.constant 0 : index
    %c0_10 = arith.constant 0 : index
    %10 = vector.load %arg2[%c0_8, %c0_9, %c0_10] : memref<16x16x128xf32, #tpu.memory_space<vmem>>, vector<16x16x128xf32>
    %cst_11 = arith.constant dense<0.000000e+00> : vector<16x128xf32>
    %11 = vector.multi_reduction <add>, %10, %cst_11 [1] : vector<16x16x128xf32> to vector<16x128xf32>
    %cst_12 = arith.constant 6.250000e-02 : f32
    %12 = vector.broadcast %cst_12 : f32 to vector<16x128xf32>
    %13 = arith.mulf %11, %12 : vector<16x128xf32>
    %14 = arith.truncf %13 : vector<16x128xf32> to vector<16x128xbf16>
    %15 = arith.truncf %1 : vector<256x128xf32> to vector<256x128xbf16>
    %16 = tpu.transpose %15, [1, 0] : vector<256x128xbf16> -> vector<128x256xbf16>
    %cst_13 = arith.constant dense<0.000000e+00> : vector<16x256xf32>
    %17 = tpu.matmul %14, %16, %cst_13 {dimension_numbers = #tpu.dot_dimension_numbers<[1], [0], [0], [1], [0, 0, 1, 1], [], []>} : vector<16x128xbf16>, vector<128x256xbf16>, vector<16x256xf32> -> vector<16x256xf32>
    %cst_14 = arith.constant 0.000000e+00 : f32
    %18 = vector.broadcast %cst_14 : f32 to vector<16x256xf32>
    %19 = arith.maximumf %17, %18 : vector<16x256xf32>
    %cst_15 = arith.constant 1.000000e-03 : f32
    %20 = vector.broadcast %cst_15 : f32 to vector<16x256xf32>
    %21 = arith.addf %19, %20 : vector<16x256xf32>
    %c0_16 = arith.constant 0 : index
    %c0_17 = arith.constant 0 : index
    %22 = vector.load %arg5[%c0_16, %c0_17] : memref<16x256xf32, #tpu.memory_space<vmem>>, vector<16x256xf32>
    tpu.vector_store %arg5[%c0_16, %c0_17], %21 {strides = array<i32>} : memref<16x256xf32, #tpu.memory_space<vmem>>, vector<16x256xf32>,
    %cst_18 = arith.constant dense<0.000000e+00> : vector<256xf32>
    %23 = vector.multi_reduction <add>, %1, %cst_18 [1] : vector<256x128xf32> to vector<256xf32>
    %24 = vector.shape_cast %23 : vector<256xf32> to vector<256x1xf32>
    %cst_19 = arith.constant 1.562500e-02 : f32
    %25 = vector.broadcast %cst_19 : f32 to vector<256x1xf32>
    %26 = arith.mulf %24, %25 : vector<256x1xf32>
    %27 = tpu.iota {dimensions = array<i32: 1>} : vector<1x128xi32>
    %c64_i32 = arith.constant 64 : i32
    %28 = vector.broadcast %c64_i32 : i32 to vector<1x128xi32>
    %29 = arith.cmpi slt, %27, %28 : vector<1x128xi32>
    %30 = arith.extui %29 : vector<1x128xi1> to vector<1x128xi32>
    %31 = arith.sitofp %30 : vector<1x128xi32> to vector<1x128xf32>
    %32 = vector.broadcast %26 : vector<256x1xf32> to vector<256x128xf32>
    %33 = vector.broadcast %31 : vector<1x128xf32> to vector<256x128xf32>
    %34 = arith.mulf %32, %33 : vector<256x128xf32>
    %35 = arith.subf %1, %34 : vector<256x128xf32>
    %36 = arith.mulf %35, %35 : vector<256x128xf32>
    %cst_20 = arith.constant dense<0.000000e+00> : vector<256xf32>
    %37 = vector.multi_reduction <add>, %36, %cst_20 [1] : vector<256x128xf32> to vector<256xf32>
    %38 = vector.shape_cast %37 : vector<256xf32> to vector<256x1xf32>
    %39 = math.sqrt %38 : vector<256x1xf32>
    %cst_21 = arith.constant 9.99999993E-9 : f32
    %40 = vector.broadcast %cst_21 : f32 to vector<256x1xf32>
    %41 = arith.maximumf %39, %40 : vector<256x1xf32>
    %42 = tpu.reciprocal %41 {approx = true} : vector<256x1xf32> -> vector<256x1xf32>
    %43 = vector.broadcast %42 : vector<256x1xf32> to vector<256x128xf32>
    %44 = arith.mulf %35, %43 : vector<256x128xf32>
    %45 = arith.truncf %44 : vector<256x128xf32> to vector<256x128xbf16>
    %46 = tpu.transpose %45, [1, 0] : vector<256x128xbf16> -> vector<128x256xbf16>
    %c0_22 = arith.constant 0 : index
    %c0_23 = arith.constant 0 : index
    %47 = vector.load %arg4[%c0_22, %c0_23] : memref<128x256xbf16, #tpu.memory_space<vmem>>, vector<128x256xbf16>
    tpu.vector_store %arg4[%c0_22, %c0_23], %46 {strides = array<i32>} : memref<128x256xbf16, #tpu.memory_space<vmem>>, vector<128x256xbf16>,
    return
  }
  func.func @transform_0(%arg0: i32) -> (i32, i32, i32) {
    %c0_i32 = arith.constant 0 : i32
    %c0_i32_0 = arith.constant 0 : i32
    %c0_i32_1 = arith.constant 0 : i32
    %c0_i32_2 = arith.constant 0 : i32
    return %c0_i32, %c0_i32_0, %c0_i32_1 : i32, i32, i32
  }
  func.func @transform_1(%arg0: i32) -> (i32, i32, i32) {
    %c0_i32 = arith.constant 0 : i32
    %c0_i32_0 = arith.constant 0 : i32
    %c0_i32_1 = arith.constant 0 : i32
    %c0_i32_2 = arith.constant 0 : i32
    return %c0_i32, %c0_i32_0, %c0_i32_1 : i32, i32, i32
  }
  func.func @transform_2(%arg0: i32) -> (i32, i32) {
    %c0_i32 = arith.constant 0 : i32
    %c0_i32_0 = arith.constant 0 : i32
    %c0_i32_1 = arith.constant 0 : i32
    return %c0_i32, %c0_i32_0 : i32, i32
  }
  func.func @transform_3(%arg0: i32) -> (i32, i32) {
    %c0_i32 = arith.constant 0 : i32
    %c0_i32_0 = arith.constant 0 : i32
    %c0_i32_1 = arith.constant 0 : i32
    return %c0_i32, %c0_i32_0 : i32, i32
  }
  func.func @transform_4(%arg0: i32) -> (i32, i32) {
    %c0_i32 = arith.constant 0 : i32
    %c0_i32_0 = arith.constant 0 : i32
    %c0_i32_1 = arith.constant 0 : i32
    return %c0_i32, %c0_i32_0 : i32, i32
  }
}

</mosaic_0001>

<llo_original>
// kernel: tpu_custom_call.1
$region0: #{tpu_custom_call.1}
  #allocation0 [shape = 'u32[]', space=smem, size = 0x4, offset = 0x4, fixed_abs, tag = 'smem constant byte address 0x4 - core index']
  #allocation1 [shape = 'u32[144,128]{1,0:T(1,128)}', space=vmem, size = 0x12000, scoped, tag = 'internal scratch']
  %s0 = inlined_call_operand.hbm [shape: f32[16,16,128], index: 0, kind: input, shape index: {}]
  %s1 = inlined_call_operand.hbm [shape: f32[16,16,128], index: 1, kind: input, shape index: {}]
  %s2 = inlined_call_operand.hbm [shape: bf16[128,128], index: 2, kind: output, shape index: {0}]
  %s3 = inlined_call_operand.hbm [shape: bf16[128,256], index: 3, kind: output, shape index: {1}]
  %s4 = inlined_call_operand.hbm [shape: f32[16,256], index: 4, kind: output, shape index: {2}]
  %5 = xla_tuple %s2, %s3, %s4
  %s6 = sld [smem:[#allocation0]]
  $region42: #{tpu_custom_call.1} parent=0
    _
  %s8 = ssub.s32 1, %s6
  %s9 = scalar_select 0, %s8, %s6
  $region1: #{tpu_custom_call.1} parent=0
    #allocation2 [shape = 'u8[131072]{0}', space=vmem, size = 0x20000, scoped, tag = 'input window, operand 0, single buffered']
    #allocation3 [shape = 's32[1]{0}', space=sflag, size = 0x4, scoped, tag = 'scoped memory for tpu_custom_call.1']
    #allocation4 [shape = 's32[1]{0}', space=sflag, size = 0x4, scoped, tag = 'scoped memory for tpu_custom_call.1']
    #allocation5 [shape = 'u8[131072]{0}', space=vmem, size = 0x20000, scoped, tag = 'input window, operand 1, single buffered']
    #allocation6 [shape = 's32[1]{0}', space=sflag, size = 0x4, scoped, tag = 'scoped memory for tpu_custom_call.1']
    #allocation7 [shape = 'u8[32768]{0}', space=vmem, size = 0x8000, scoped, tag = 'output window, operand 0, single buffered']
    #allocation8 [shape = 'u8[65536]{0}', space=vmem, size = 0x10000, scoped, tag = 'output window, operand 1, single buffered']
    #allocation9 [shape = 's32[1]{0}', space=sflag, size = 0x4, scoped, tag = 'scoped memory for tpu_custom_call.1']
    #allocation10 [shape = 'u8[16384]{0}', space=vmem, size = 0x4000, scoped, tag = 'output window, operand 2, single buffered']
    %10 = vsyncpa [#allocation3], 0
    %11 = vsyncpa [#allocation6], 0
    %12 = vsyncpa [#allocation4], 0
    %13 = vsyncpa [#allocation9], 0
    // Predicated region
    $region2: #{tpu_custom_call.1} parent=1 // pred_check
      _
    $region3: #{tpu_custom_call.1} parent=1 // pred_check_branch
      %15 = sbr.rel (0) target = $region5
    $region4: #{tpu_custom_call.1} parent=1 // pred_region
      %s17 = ssub.s32 4096, 4096
      %18 = vsyncadd [#allocation3], %s17
      %s19 = sshll.u32 [#allocation2], 4
      %s20 = int_to_ptr.vmem [resolvable:$true] %s19
      %25 = dma.hbm_to_vmem [thread:$0]  %s0, 4096, %s20, [#allocation3], 128, 128, 8
    $region5: #{tpu_custom_call.1} parent=1 // pred_fallthru
      _
    // Predicated region
    $region6: #{tpu_custom_call.1} parent=1 // pred_check
      _
    $region7: #{tpu_custom_call.1} parent=1 // pred_check_branch
      %27 = sbr.rel (0) target = $region9
    $region8: #{tpu_custom_call.1} parent=1 // pred_region
      %s29 = ssub.s32 4096, 4096
      %30 = vsyncadd [#allocation6], %s29
      %s31 = sshll.u32 [#allocation5], 4
      %s32 = int_to_ptr.vmem [resolvable:$true] %s31
      %37 = dma.hbm_to_vmem [thread:$0]  %s1, 4096, %s32, [#allocation6], 128, 128, 8
    $region9: #{tpu_custom_call.1} parent=1 // pred_fallthru
      _
    // Predicated region
    $region10: #{tpu_custom_call.1} parent=1 // pred_check
      _
    $region11: #{tpu_custom_call.1} parent=1 // pred_check_branch
      %39 = sbr.rel (0) target = $region13
    $region12: #{tpu_custom_call.1} parent=1 // pred_region
      %40 = dma.done [#allocation3], 4096
    $region13: #{tpu_custom_call.1} parent=1 // pred_fallthru
      _
    // Predicated region
    $region14: #{tpu_custom_call.1} parent=1 // pred_check
      _
    $region15: #{tpu_custom_call.1} parent=1 // pred_check_branch
      %42 = sbr.rel (0) target = $region17
    $region16: #{tpu_custom_call.1} parent=1 // pred_region
      %43 = dma.done [#allocation6], 4096
    $region17: #{tpu_custom_call.1} parent=1 // pred_fallthru
      _
    %v45 = vld [vmem:[#allocation2] sm:$0xff]
    %v46 = vld [vmem:[#allocation2 + $0x8] sm:$0xff]
    %v47 = vld [vmem:[#allocation2 + $0x10] sm:$0xff]
    %v48 = vld [vmem:[#allocation2 + $0x18] sm:$0xff]
    %v49 = vld [vmem:[#allocation2 + $0x20] sm:$0xff]
    %v50 = vld [vmem:[#allocation2 + $0x28] sm:$0xff]
    %v51 = vld [vmem:[#allocation2 + $0x30] sm:$0xff]
    %v52 = vld [vmem:[#allocation2 + $0x38] sm:$0xff]
    %v53 = vld [vmem:[#allocation2 + $0x40] sm:$0xff]
    %v54 = vld [vmem:[#allocation2 + $0x48] sm:$0xff]
    %v55 = vld [vmem:[#allocation2 + $0x50] sm:$0xff]
    %v56 = vld [vmem:[#allocation2 + $0x58] sm:$0xff]
    %v57 = vld [vmem:[#allocation2 + $0x60] sm:$0xff]
    %v58 = vld [vmem:[#allocation2 + $0x68] sm:$0xff]
    %v59 = vld [vmem:[#allocation2 + $0x70] sm:$0xff]
    %v60 = vld [vmem:[#allocation2 + $0x78] sm:$0xff]
    %v61 = vld [vmem:[#allocation2 + $0x80] sm:$0xff]
    %v62 = vld [vmem:[#allocation2 + $0x88] sm:$0xff]
    %v63 = vld [vmem:[#allocation2 + $0x90] sm:$0xff]
    %v64 = vld [vmem:[#allocation2 + $0x98] sm:$0xff]
    %v65 = vld [vmem:[#allocation2 + $0xa0] sm:$0xff]
    %v66 = vld [vmem:[#allocation2 + $0xa8] sm:$0xff]
    %v67 = vld [vmem:[#allocation2 + $0xb0] sm:$0xff]
    %v68 = vld [vmem:[#allocation2 + $0xb8] sm:$0xff]
    %v69 = vld [vmem:[#allocation2 + $0xc0] sm:$0xff]
    %v70 = vld [vmem:[#allocation2 + $0xc8] sm:$0xff]
    %v71 = vld [vmem:[#allocation2 + $0xd0] sm:$0xff]
    %v72 = vld [vmem:[#allocation2 + $0xd8] sm:$0xff]
    %v73 = vld [vmem:[#allocation2 + $0xe0] sm:$0xff]
    %v74 = vld [vmem:[#allocation2 + $0xe8] sm:$0xff]
    %v75 = vld [vmem:[#allocation2 + $0xf0] sm:$0xff]
    %v76 = vld [vmem:[#allocation2 + $0xf8] sm:$0xff]
    %v77 = vadd.f32 %v45, %v46
    %v78 = vrot.slane %v77, 4
    %v79 = vadd.f32 %v77, %v78
    %v80 = vrot.slane %v79, 2
    %v81 = vadd.f32 %v79, %v80
    %v82 = vrot.slane %v81, 1
    %v83 = vadd.f32 %v81, %v82
    %v84 = vadd.f32 %v47, %v48
    %v85 = vrot.slane %v84, 4
    %v86 = vadd.f32 %v84, %v85
    %v87 = vrot.slane %v86, 2
    %v88 = vadd.f32 %v86, %v87
    %v89 = vrot.slane %v88, 1
    %v90 = vadd.f32 %v88, %v89
    %v91 = vadd.f32 %v49, %v50
    %v92 = vrot.slane %v91, 4
    %v93 = vadd.f32 %v91, %v92
    %v94 = vrot.slane %v93, 2
    %v95 = vadd.f32 %v93, %v94
    %v96 = vrot.slane %v95, 1
    %v97 = vadd.f32 %v95, %v96
    %v98 = vadd.f32 %v51, %v52
    %v99 = vrot.slane %v98, 4
    %v100 = vadd.f32 %v98, %v99
    %v101 = vrot.slane %v100, 2
    %v102 = vadd.f32 %v100, %v101
    %v103 = vrot.slane %v102, 1
    %v104 = vadd.f32 %v102, %v103
    %v105 = vadd.f32 %v53, %v54
    %v106 = vrot.slane %v105, 4
    %v107 = vadd.f32 %v105, %v106
    %v108 = vrot.slane %v107, 2
    %v109 = vadd.f32 %v107, %v108
    %v110 = vrot.slane %v109, 1
    %v111 = vadd.f32 %v109, %v110
    %v112 = vadd.f32 %v55, %v56
    %v113 = vrot.slane %v112, 4
    %v114 = vadd.f32 %v112, %v113
    %v115 = vrot.slane %v114, 2
    %v116 = vadd.f32 %v114, %v115
    %v117 = vrot.slane %v116, 1
    %v118 = vadd.f32 %v116, %v117
    %v119 = vadd.f32 %v57, %v58
    %v120 = vrot.slane %v119, 4
    %v121 = vadd.f32 %v119, %v120
    %v122 = vrot.slane %v121, 2
    %v123 = vadd.f32 %v121, %v122
    %v124 = vrot.slane %v123, 1
    %v125 = vadd.f32 %v123, %v124
    %v126 = vadd.f32 %v59, %v60
    %v127 = vrot.slane %v126, 4
    %v128 = vadd.f32 %v126, %v127
    %v129 = vrot.slane %v128, 2
    %v130 = vadd.f32 %v128, %v129
    %v131 = vrot.slane %v130, 1
    %v132 = vadd.f32 %v130, %v131
    %v133 = vadd.f32 %v61, %v62
    %v134 = vrot.slane %v133, 4
    %v135 = vadd.f32 %v133, %v134
    %v136 = vrot.slane %v135, 2
    %v137 = vadd.f32 %v135, %v136
    %v138 = vrot.slane %v137, 1
    %v139 = vadd.f32 %v137, %v138
    %v140 = vadd.f32 %v63, %v64
    %v141 = vrot.slane %v140, 4
    %v142 = vadd.f32 %v140, %v141
    %v143 = vrot.slane %v142, 2
    %v144 = vadd.f32 %v142, %v143
    %v145 = vrot.slane %v144, 1
    %v146 = vadd.f32 %v144, %v145
    %v147 = vadd.f32 %v65, %v66
    %v148 = vrot.slane %v147, 4
    %v149 = vadd.f32 %v147, %v148
    %v150 = vrot.slane %v149, 2
    %v151 = vadd.f32 %v149, %v150
    %v152 = vrot.slane %v151, 1
    %v153 = vadd.f32 %v151, %v152
    %v154 = vadd.f32 %v67, %v68
    %v155 = vrot.slane %v154, 4
    %v156 = vadd.f32 %v154, %v155
    %v157 = vrot.slane %v156, 2
    %v158 = vadd.f32 %v156, %v157
    %v159 = vrot.slane %v158, 1
    %v160 = vadd.f32 %v158, %v159
    %v161 = vadd.f32 %v69, %v70
    %v162 = vrot.slane %v161, 4
    %v163 = vadd.f32 %v161, %v162
    %v164 = vrot.slane %v163, 2
    %v165 = vadd.f32 %v163, %v164
    %v166 = vrot.slane %v165, 1
    %v167 = vadd.f32 %v165, %v166
    %v168 = vadd.f32 %v71, %v72
    %v169 = vrot.slane %v168, 4
    %v170 = vadd.f32 %v168, %v169
    %v171 = vrot.slane %v170, 2
    %v172 = vadd.f32 %v170, %v171
    %v173 = vrot.slane %v172, 1
    %v174 = vadd.f32 %v172, %v173
    %v175 = vadd.f32 %v73, %v74
    %v176 = vrot.slane %v175, 4
    %v177 = vadd.f32 %v175, %v176
    %v178 = vrot.slane %v177, 2
    %v179 = vadd.f32 %v177, %v178
    %v180 = vrot.slane %v179, 1
    %v181 = vadd.f32 %v179, %v180
    %v182 = vadd.f32 %v75, %v76
    %v183 = vrot.slane %v182, 4
    %v184 = vadd.f32 %v182, %v183
    %v185 = vrot.slane %v184, 2
    %v186 = vadd.f32 %v184, %v185
    %v187 = vrot.slane %v186, 1
    %v188 = vadd.f32 %v186, %v187
    %v189 = vmul.f32 %v83, 0.0625
    %v190 = vmul.f32 %v90, 0.0625
    %v191 = vmul.f32 %v97, 0.0625
    %v192 = vmul.f32 %v104, 0.0625
    %v193 = vmul.f32 %v111, 0.0625
    %v194 = vmul.f32 %v118, 0.0625
    %v195 = vmul.f32 %v125, 0.0625
    %v196 = vmul.f32 %v132, 0.0625
    %v197 = vmul.f32 %v139, 0.0625
    %v198 = vmul.f32 %v146, 0.0625
    %v199 = vmul.f32 %v153, 0.0625
    %v200 = vmul.f32 %v160, 0.0625
    %v201 = vmul.f32 %v167, 0.0625
    %v202 = vmul.f32 %v174, 0.0625
    %v203 = vmul.f32 %v181, 0.0625
    %v204 = vmul.f32 %v188, 0.0625
    %vm221 = vcmask 1041409
    %v222 = vsel %vm221, %v190, %v189
    %vm223 = vcmask 1042434
    %v224 = vsel %vm223, %v191, %v222
    %vm225 = vcmask 1043459
    %v226 = vsel %vm225, %v192, %v224
    %vm227 = vcmask 1044484
    %v228 = vsel %vm227, %v193, %v226
    %vm229 = vcmask 1045509
    %v230 = vsel %vm229, %v194, %v228
    %vm231 = vcmask 1046534
    %v232 = vsel %vm231, %v195, %v230
    %vm233 = vcmask 1047559
    %v234 = vsel %vm233, %v196, %v232
    %v235 = vsel %vm221, %v198, %v197
    %v236 = vsel %vm223, %v199, %v235
    %v237 = vsel %vm225, %v200, %v236
    %v238 = vsel %vm227, %v201, %v237
    %v239 = vsel %vm229, %v202, %v238
    %v240 = vsel %vm231, %v203, %v239
    %v241 = vsel %vm233, %v204, %v240
    %244 = vxpose.xlu0.b32.start [1/16] %v234, 128
    %245 = vxpose.xlu0.b32.cont [2/16] %v241, 128
    %246 = vxpose.xlu0.b32.cont [3/16] 0.0, 128
    %247 = vxpose.xlu0.b32.cont [4/16] 0.0, 128
    %248 = vxpose.xlu0.b32.cont [5/16] 0.0, 128
    %249 = vxpose.xlu0.b32.cont [6/16] 0.0, 128
    %250 = vxpose.xlu0.b32.cont [7/16] 0.0, 128
    %251 = vxpose.xlu0.b32.cont [8/16] 0.0, 128
    %252 = vxpose.xlu0.b32.cont [9/16] 0.0, 128
    %253 = vxpose.xlu0.b32.cont [10/16] 0.0, 128
    %254 = vxpose.xlu0.b32.cont [11/16] 0.0, 128
    %255 = vxpose.xlu0.b32.cont [12/16] 0.0, 128
    %256 = vxpose.xlu0.b32.cont [13/16] 0.0, 128
    %257 = vxpose.xlu0.b32.cont [14/16] 0.0, 128
    %258 = vxpose.xlu0.b32.cont [15/16] 0.0, 128
    %259 = vxpose.xlu0.b32.end [16/16] 0.0, 128
    %v260 = vpop.trf.xlu0
    %v261 = vpop.trf.xlu0
    %v262 = vpop.trf.xlu0
    %v263 = vpop.trf.xlu0
    %v264 = vpop.trf.xlu0
    %v265 = vpop.trf.xlu0
    %v266 = vpop.trf.xlu0
    %v267 = vpop.trf.xlu0
    %v268 = vpop.trf.xlu0
    %v269 = vpop.trf.xlu0
    %v270 = vpop.trf.xlu0
    %v271 = vpop.trf.xlu0
    %v272 = vpop.trf.xlu0
    %v273 = vpop.trf.xlu0
    %v274 = vpop.trf.xlu0
    %v275 = vpop.trf.xlu0
    %276 = vst [vmem:[#allocation7] sm:$0xf] 0
    %277 = vst [vmem:[#allocation7 + $0x4] sm:$0xf] 0
    %278 = vst [vmem:[#allocation7 + $0x8] sm:$0xf] 0
    %279 = vst [vmem:[#allocation7 + $0xc] sm:$0xf] 0
    %280 = vst [vmem:[#allocation7 + $0x10] sm:$0xf] 0
    %281 = vst [vmem:[#allocation7 + $0x14] sm:$0xf] 0
    %282 = vst [vmem:[#allocation7 + $0x18] sm:$0xf] 0
    %283 = vst [vmem:[#allocation7 + $0x1c] sm:$0xf] 0
    %284 = vst [vmem:[#allocation7 + $0x20] sm:$0xf] 0
    %285 = vst [vmem:[#allocation7 + $0x24] sm:$0xf] 0
    %286 = vst [vmem:[#allocation7 + $0x28] sm:$0xf] 0
    %287 = vst [vmem:[#allocation7 + $0x2c] sm:$0xf] 0
    %288 = vst [vmem:[#allocation7 + $0x30] sm:$0xf] 0
    %289 = vst [vmem:[#allocation7 + $0x34] sm:$0xf] 0
    %290 = vst [vmem:[#allocation7 + $0x38] sm:$0xf] 0
    %291 = vst [vmem:[#allocation7 + $0x3c] sm:$0xf] 0
    %v292 = vpack.c.bf16 %v261, %v260
    %v293 = vpack.c.bf16 %v263, %v262
    %v294 = vpack.c.bf16 %v265, %v264
    %v295 = vpack.c.bf16 %v267, %v266
    %v296 = vpack.c.bf16 %v269, %v268
    %v297 = vpack.c.bf16 %v271, %v270
    %v298 = vpack.c.bf16 %v273, %v272
    %v299 = vpack.c.bf16 %v275, %v274
    %v308 = vunpack.c.l.b16 %v292
    %v309 = vunpack.c.h.b16 %v292
    %v310 = vunpack.c.l.b16 %v293
    %v311 = vunpack.c.h.b16 %v293
    %v312 = vunpack.c.l.b16 %v294
    %v313 = vunpack.c.h.b16 %v294
    %v314 = vunpack.c.l.b16 %v295
    %v315 = vunpack.c.h.b16 %v295
    %v316 = vunpack.c.l.b16 %v296
    %v317 = vunpack.c.h.b16 %v296
    %v318 = vunpack.c.l.b16 %v297
    %v319 = vunpack.c.h.b16 %v297
    %v320 = vunpack.c.l.b16 %v298
    %v321 = vunpack.c.h.b16 %v298
    %v322 = vunpack.c.l.b16 %v299
    %v323 = vunpack.c.h.b16 %v299
    %v324 = vpack.c.b16 %v308, %v308
    %v325 = vpack.c.b16 %v309, %v309
    %v326 = vpack.c.b16 %v310, %v310
    %v327 = vpack.c.b16 %v311, %v311
    %v328 = vpack.c.b16 %v312, %v312
    %v329 = vpack.c.b16 %v313, %v313
    %v330 = vpack.c.b16 %v314, %v314
    %v331 = vpack.c.b16 %v315, %v315
    %v332 = vpack.c.b16 %v316, %v316
    %v333 = vpack.c.b16 %v317, %v317
    %v334 = vpack.c.b16 %v318, %v318
    %v335 = vpack.c.b16 %v319, %v319
    %v336 = vpack.c.b16 %v320, %v320
    %v337 = vpack.c.b16 %v321, %v321
    %v338 = vpack.c.b16 %v322, %v322
    %v339 = vpack.c.b16 %v323, %v323
    %vm356 = vcmask 125952
    %357 = vst.msk [vmem:[#allocation7] sm:$0xf] %vm356, %v324
    %358 = vst.msk [vmem:[#allocation7 + $0x4] sm:$0xf] %vm356, %v325
    %359 = vst.msk [vmem:[#allocation7 + $0x8] sm:$0xf] %vm356, %v326
    %360 = vst.msk [vmem:[#allocation7 + $0xc] sm:$0xf] %vm356, %v327
    %361 = vst.msk [vmem:[#allocation7 + $0x10] sm:$0xf] %vm356, %v328
    %362 = vst.msk [vmem:[#allocation7 + $0x14] sm:$0xf] %vm356, %v329
    %363 = vst.msk [vmem:[#allocation7 + $0x18] sm:$0xf] %vm356, %v330
    %364 = vst.msk [vmem:[#allocation7 + $0x1c] sm:$0xf] %vm356, %v331
    %365 = vst.msk [vmem:[#allocation7 + $0x20] sm:$0xf] %vm356, %v332
    %366 = vst.msk [vmem:[#allocation7 + $0x24] sm:$0xf] %vm356, %v333
    %367 = vst.msk [vmem:[#allocation7 + $0x28] sm:$0xf] %vm356, %v334
    %368 = vst.msk [vmem:[#allocation7 + $0x2c] sm:$0xf] %vm356, %v335
    %369 = vst.msk [vmem:[#allocation7 + $0x30] sm:$0xf] %vm356, %v336
    %370 = vst.msk [vmem:[#allocation7 + $0x34] sm:$0xf] %vm356, %v337
    %371 = vst.msk [vmem:[#allocation7 + $0x38] sm:$0xf] %vm356, %v338
    %372 = vst.msk [vmem:[#allocation7 + $0x3c] sm:$0xf] %vm356, %v339
    %v373 = vld [vmem:[#allocation5] sm:$0xff]
    %v374 = vld [vmem:[#allocation5 + $0x8] sm:$0xff]
    %v375 = vld [vmem:[#allocation5 + $0x10] sm:$0xff]
    %v376 = vld [vmem:[#allocation5 + $0x18] sm:$0xff]
    %v377 = vld [vmem:[#allocation5 + $0x20] sm:$0xff]
    %v378 = vld [vmem:[#allocation5 + $0x28] sm:$0xff]
    %v379 = vld [vmem:[#allocation5 + $0x30] sm:$0xff]
    %v380 = vld [vmem:[#allocation5 + $0x38] sm:$0xff]
    %v381 = vld [vmem:[#allocation5 + $0x40] sm:$0xff]
    %v382 = vld [vmem:[#allocation5 + $0x48] sm:$0xff]
    %v383 = vld [vmem:[#allocation5 + $0x50] sm:$0xff]
    %v384 = vld [vmem:[#allocation5 + $0x58] sm:$0xff]
    %v385 = vld [vmem:[#allocation5 + $0x60] sm:$0xff]
    %v386 = vld [vmem:[#allocation5 + $0x68] sm:$0xff]
    %v387 = vld [vmem:[#allocation5 + $0x70] sm:$0xff]
    %v388 = vld [vmem:[#allocation5 + $0x78] sm:$0xff]
    %v389 = vld [vmem:[#allocation5 + $0x80] sm:$0xff]
    %v390 = vld [vmem:[#allocation5 + $0x88] sm:$0xff]
    %v391 = vld [vmem:[#allocation5 + $0x90] sm:$0xff]
    %v392 = vld [vmem:[#allocation5 + $0x98] sm:$0xff]
    %v393 = vld [vmem:[#allocation5 + $0xa0] sm:$0xff]
    %v394 = vld [vmem:[#allocation5 + $0xa8] sm:$0xff]
    %v395 = vld [vmem:[#allocation5 + $0xb0] sm:$0xff]
    %v396 = vld [vmem:[#allocation5 + $0xb8] sm:$0xff]
    %v397 = vld [vmem:[#allocation5 + $0xc0] sm:$0xff]
    %v398 = vld [vmem:[#allocation5 + $0xc8] sm:$0xff]
    %v399 = vld [vmem:[#allocation5 + $0xd0] sm:$0xff]
    %v400 = vld [vmem:[#allocation5 + $0xd8] sm:$0xff]
    %v401 = vld [vmem:[#allocation5 + $0xe0] sm:$0xff]
    %v402 = vld [vmem:[#allocation5 + $0xe8] sm:$0xff]
    %v403 = vld [vmem:[#allocation5 + $0xf0] sm:$0xff]
    %v404 = vld [vmem:[#allocation5 + $0xf8] sm:$0xff]
    %v405 = vadd.f32 %v373, %v374
    %v406 = vrot.slane %v405, 4
    %v407 = vadd.f32 %v405, %v406
    %v408 = vrot.slane %v407, 2
    %v409 = vadd.f32 %v407, %v408
    %v410 = vrot.slane %v409, 1
    %v411 = vadd.f32 %v409, %v410
    %v412 = vadd.f32 %v375, %v376
    %v413 = vrot.slane %v412, 4
    %v414 = vadd.f32 %v412, %v413
    %v415 = vrot.slane %v414, 2
    %v416 = vadd.f32 %v414, %v415
    %v417 = vrot.slane %v416, 1
    %v418 = vadd.f32 %v416, %v417
    %v419 = vadd.f32 %v377, %v378
    %v420 = vrot.slane %v419, 4
    %v421 = vadd.f32 %v419, %v420
    %v422 = vrot.slane %v421, 2
    %v423 = vadd.f32 %v421, %v422
    %v424 = vrot.slane %v423, 1
    %v425 = vadd.f32 %v423, %v424
    %v426 = vadd.f32 %v379, %v380
    %v427 = vrot.slane %v426, 4
    %v428 = vadd.f32 %v426, %v427
    %v429 = vrot.slane %v428, 2
    %v430 = vadd.f32 %v428, %v429
    %v431 = vrot.slane %v430, 1
    %v432 = vadd.f32 %v430, %v431
    %v433 = vadd.f32 %v381, %v382
    %v434 = vrot.slane %v433, 4
    %v435 = vadd.f32 %v433, %v434
    %v436 = vrot.slane %v435, 2
    %v437 = vadd.f32 %v435, %v436
    %v438 = vrot.slane %v437, 1
    %v439 = vadd.f32 %v437, %v438
    %v440 = vadd.f32 %v383, %v384
    %v441 = vrot.slane %v440, 4
    %v442 = vadd.f32 %v440, %v441
    %v443 = vrot.slane %v442, 2
    %v444 = vadd.f32 %v442, %v443
    %v445 = vrot.slane %v444, 1
    %v446 = vadd.f32 %v444, %v445
    %v447 = vadd.f32 %v385, %v386
    %v448 = vrot.slane %v447, 4
    %v449 = vadd.f32 %v447, %v448
    %v450 = vrot.slane %v449, 2
    %v451 = vadd.f32 %v449, %v450
    %v452 = vrot.slane %v451, 1
    %v453 = vadd.f32 %v451, %v452
    %v454 = vadd.f32 %v387, %v388
    %v455 = vrot.slane %v454, 4
    %v456 = vadd.f32 %v454, %v455
    %v457 = vrot.slane %v456, 2
    %v458 = vadd.f32 %v456, %v457
    %v459 = vrot.slane %v458, 1
    %v460 = vadd.f32 %v458, %v459
    %v461 = vadd.f32 %v389, %v390
    %v462 = vrot.slane %v461, 4
    %v463 = vadd.f32 %v461, %v462
    %v464 = vrot.slane %v463, 2
    %v465 = vadd.f32 %v463, %v464
    %v466 = vrot.slane %v465, 1
    %v467 = vadd.f32 %v465, %v466
    %v468 = vadd.f32 %v391, %v392
    %v469 = vrot.slane %v468, 4
    %v470 = vadd.f32 %v468, %v469
    %v471 = vrot.slane %v470, 2
    %v472 = vadd.f32 %v470, %v471
    %v473 = vrot.slane %v472, 1
    %v474 = vadd.f32 %v472, %v473
    %v475 = vadd.f32 %v393, %v394
    %v476 = vrot.slane %v475, 4
    %v477 = vadd.f32 %v475, %v476
    %v478 = vrot.slane %v477, 2
    %v479 = vadd.f32 %v477, %v478
    %v480 = vrot.slane %v479, 1
    %v481 = vadd.f32 %v479, %v480
    %v482 = vadd.f32 %v395, %v396
    %v483 = vrot.slane %v482, 4
    %v484 = vadd.f32 %v482, %v483
    %v485 = vrot.slane %v484, 2
    %v486 = vadd.f32 %v484, %v485
    %v487 = vrot.slane %v486, 1
    %v488 = vadd.f32 %v486, %v487
    %v489 = vadd.f32 %v397, %v398
    %v490 = vrot.slane %v489, 4
    %v491 = vadd.f32 %v489, %v490
    %v492 = vrot.slane %v491, 2
    %v493 = vadd.f32 %v491, %v492
    %v494 = vrot.slane %v493, 1
    %v495 = vadd.f32 %v493, %v494
    %v496 = vadd.f32 %v399, %v400
    %v497 = vrot.slane %v496, 4
    %v498 = vadd.f32 %v496, %v497
    %v499 = vrot.slane %v498, 2
    %v500 = vadd.f32 %v498, %v499
    %v501 = vrot.slane %v500, 1
    %v502 = vadd.f32 %v500, %v501
    %v503 = vadd.f32 %v401, %v402
    %v504 = vrot.slane %v503, 4
    %v505 = vadd.f32 %v503, %v504
    %v506 = vrot.slane %v505, 2
    %v507 = vadd.f32 %v505, %v506
    %v508 = vrot.slane %v507, 1
    %v509 = vadd.f32 %v507, %v508
    %v510 = vadd.f32 %v403, %v404
    %v511 = vrot.slane %v510, 4
    %v512 = vadd.f32 %v510, %v511
    %v513 = vrot.slane %v512, 2
    %v514 = vadd.f32 %v512, %v513
    %v515 = vrot.slane %v514, 1
    %v516 = vadd.f32 %v514, %v515
    %v517 = vmul.f32 %v411, 0.0625
    %v518 = vmul.f32 %v418, 0.0625
    %v519 = vmul.f32 %v425, 0.0625
    %v520 = vmul.f32 %v432, 0.0625
    %v521 = vmul.f32 %v439, 0.0625
    %v522 = vmul.f32 %v446, 0.0625
    %v523 = vmul.f32 %v453, 0.0625
    %v524 = vmul.f32 %v460, 0.0625
    %v525 = vmul.f32 %v467, 0.0625
    %v526 = vmul.f32 %v474, 0.0625
    %v527 = vmul.f32 %v481, 0.0625
    %v528 = vmul.f32 %v488, 0.0625
    %v529 = vmul.f32 %v495, 0.0625
    %v530 = vmul.f32 %v502, 0.0625
    %v531 = vmul.f32 %v509, 0.0625
    %v532 = vmul.f32 %v516, 0.0625
    %v533 = vpack.c.bf16 %v517, %v517
    %v534 = vpack.c.bf16 %v518, %v518
    %v535 = vpack.c.bf16 %v519, %v519
    %v536 = vpack.c.bf16 %v520, %v520
    %v537 = vpack.c.bf16 %v521, %v521
    %v538 = vpack.c.bf16 %v522, %v522
    %v539 = vpack.c.bf16 %v523, %v523
    %v540 = vpack.c.bf16 %v524, %v524
    %v541 = vpack.c.bf16 %v525, %v525
    %v542 = vpack.c.bf16 %v526, %v526
    %v543 = vpack.c.bf16 %v527, %v527
    %v544 = vpack.c.bf16 %v528, %v528
    %v545 = vpack.c.bf16 %v529, %v529
    %v546 = vpack.c.bf16 %v530, %v530
    %v547 = vpack.c.bf16 %v531, %v531
    %v548 = vpack.c.bf16 %v532, %v532
    %v549 = vpack.c.bf16 %v46, %v45
    %v550 = vpack.c.bf16 %v48, %v47
    %v551 = vpack.c.bf16 %v50, %v49
    %v552 = vpack.c.bf16 %v52, %v51
    %v553 = vpack.c.bf16 %v54, %v53
    %v554 = vpack.c.bf16 %v56, %v55
    %v555 = vpack.c.bf16 %v58, %v57
    %v556 = vpack.c.bf16 %v60, %v59
    %v557 = vpack.c.bf16 %v62, %v61
    %v558 = vpack.c.bf16 %v64, %v63
    %v559 = vpack.c.bf16 %v66, %v65
    %v560 = vpack.c.bf16 %v68, %v67
    %v561 = vpack.c.bf16 %v70, %v69
    %v562 = vpack.c.bf16 %v72, %v71
    %v563 = vpack.c.bf16 %v74, %v73
    %v564 = vpack.c.bf16 %v76, %v75
    %v581 = vunpack.c.l.b16 %v533
    %v582 = vunpack.c.l.b16 %v534
    %v583 = vunpack.c.l.b16 %v535
    %v584 = vunpack.c.l.b16 %v536
    %v585 = vunpack.c.l.b16 %v537
    %v586 = vunpack.c.l.b16 %v538
    %v587 = vunpack.c.l.b16 %v539
    %v588 = vunpack.c.l.b16 %v540
    %v589 = vunpack.c.l.b16 %v541
    %v590 = vunpack.c.l.b16 %v542
    %v591 = vunpack.c.l.b16 %v543
    %v592 = vunpack.c.l.b16 %v544
    %v593 = vunpack.c.l.b16 %v545
    %v594 = vunpack.c.l.b16 %v546
    %v595 = vunpack.c.l.b16 %v547
    %v596 = vunpack.c.l.b16 %v548
    %v597 = vsel %vm221, %v582, %v581
    %v598 = vsel %vm223, %v583, %v597
    %v599 = vsel %vm225, %v584, %v598
    %v600 = vsel %vm227, %v585, %v599
    %v601 = vsel %vm229, %v586, %v600
    %v602 = vsel %vm231, %v587, %v601
    %v603 = vsel %vm233, %v588, %v602
    %v604 = vsel %vm221, %v590, %v589
    %v605 = vsel %vm223, %v591, %v604
    %v606 = vsel %vm225, %v592, %v605
    %v607 = vsel %vm227, %v593, %v606
    %v608 = vsel %vm229, %v594, %v607
    %v609 = vsel %vm231, %v595, %v608
    %v610 = vsel %vm233, %v596, %v609
    %v611 = vpack.c.b16 %v610, %v603
    %613 = vmatprep.subr.bf16.mxu0 0
    %614 = vmatpush1.bf16.xpose.msra.mxu0 %v549
    %615 = vmatprep.subr.bf16.mxu0 0
    %616 = vmatpush1.bf16.xpose.msra.mxu0 %v550
    %617 = vmatprep.subr.bf16.mxu0 0
    %618 = vmatpush1.bf16.xpose.msra.mxu0 %v551
    %619 = vmatprep.subr.bf16.mxu0 0
    %620 = vmatpush1.bf16.xpose.msra.mxu0 %v552
    %621 = vmatprep.subr.bf16.mxu0 0
    %622 = vmatpush1.bf16.xpose.msra.mxu0 %v553
    %623 = vmatprep.subr.bf16.mxu0 0
    %624 = vmatpush1.bf16.xpose.msra.mxu0 %v554
    %625 = vmatprep.subr.bf16.mxu0 0
    %626 = vmatpush1.bf16.xpose.msra.mxu0 %v555
    %627 = vmatprep.subr.bf16.mxu0 0
    %628 = vmatpush1.bf16.xpose.msra.mxu0 %v556
    %629 = vmatprep.subr.bf16.mxu0 0
    %630 = vmatpush1.bf16.xpose.msra.mxu0 %v557
    %631 = vmatprep.subr.bf16.mxu0 0
    %632 = vmatpush1.bf16.xpose.msra.mxu0 %v558
    %633 = vmatprep.subr.bf16.mxu0 0
    %634 = vmatpush1.bf16.xpose.msra.mxu0 %v559
    %635 = vmatprep.subr.bf16.mxu0 0
    %636 = vmatpush1.bf16.xpose.msra.mxu0 %v560
    %637 = vmatprep.subr.bf16.mxu0 0
    %638 = vmatpush1.bf16.xpose.msra.mxu0 %v561
    %639 = vmatprep.subr.bf16.mxu0 0
    %640 = vmatpush1.bf16.xpose.msra.mxu0 %v562
    %641 = vmatprep.subr.bf16.mxu0 0
    %642 = vmatpush1.bf16.xpose.msra.mxu0 %v563
    %643 = vmatprep.subr.bf16.mxu0 0
    %644 = vmatpush1.bf16.xpose.msra.mxu0 %v564
    %645 = vmatprep.mubr.bf16.mxu0 0
    %646 = vmatmul.mubr.bf16.gmra.mrb[0].mxu0 %v611
    %v647 = vpop.f32.mrb[0].mxu0
    %v648 = vadd.f32 0.0, %v647
    %v649 = vpop.f32.mrb[0].mxu0
    %v650 = vadd.f32 0.0, %v649
    %v651 = vpop.f32.mrb[0].mxu0
    %v652 = vadd.f32 0.0, %v651
    %v653 = vpop.f32.mrb[0].mxu0
    %v654 = vadd.f32 0.0, %v653
    %655 = vdwg.mxu0
    %v656 = vmax.f32 %v648, 0.0
    %v657 = vmax.f32 %v650, 0.0
    %v658 = vmax.f32 %v652, 0.0
    %v659 = vmax.f32 %v654, 0.0
    %v660 = vadd.f32 %v656, 0.001
    %v661 = vadd.f32 %v657, 0.001
    %v662 = vadd.f32 %v658, 0.001
    %v663 = vadd.f32 %v659, 0.001
    %664 = vst [vmem:[#allocation10] sm:$0xff] %v660
    %665 = vst [vmem:[#allocation10 + $0x8] sm:$0xff] %v661
    %666 = vst [vmem:[#allocation10 + $0x10] sm:$0xff] %v662
    %667 = vst [vmem:[#allocation10 + $0x18] sm:$0xff] %v663
    %668 = vadd.xlane.f32.xlu0 %v45
    %v669 = vpop.xlane.xlu0 %668
    %670 = vadd.xlane.f32.xlu0 %v46
    %v671 = vpop.xlane.xlu0 %670
    %672 = vadd.xlane.f32.xlu0 %v47
    %v673 = vpop.xlane.xlu0 %672
    %674 = vadd.xlane.f32.xlu0 %v48
    %v675 = vpop.xlane.xlu0 %674
    %676 = vadd.xlane.f32.xlu0 %v49
    %v677 = vpop.xlane.xlu0 %676
    %678 = vadd.xlane.f32.xlu0 %v50
    %v679 = vpop.xlane.xlu0 %678
    %680 = vadd.xlane.f32.xlu0 %v51
    %v681 = vpop.xlane.xlu0 %680
    %682 = vadd.xlane.f32.xlu0 %v52
    %v683 = vpop.xlane.xlu0 %682
    %684 = vadd.xlane.f32.xlu0 %v53
    %v685 = vpop.xlane.xlu0 %684
    %686 = vadd.xlane.f32.xlu0 %v54
    %v687 = vpop.xlane.xlu0 %686
    %688 = vadd.xlane.f32.xlu0 %v55
    %v689 = vpop.xlane.xlu0 %688
    %690 = vadd.xlane.f32.xlu0 %v56
    %v691 = vpop.xlane.xlu0 %690
    %692 = vadd.xlane.f32.xlu0 %v57
    %v693 = vpop.xlane.xlu0 %692
    %694 = vadd.xlane.f32.xlu0 %v58
    %v695 = vpop.xlane.xlu0 %694
    %696 = vadd.xlane.f32.xlu0 %v59
    %v697 = vpop.xlane.xlu0 %696
    %698 = vadd.xlane.f32.xlu0 %v60
    %v699 = vpop.xlane.xlu0 %698
    %700 = vadd.xlane.f32.xlu0 %v61
    %v701 = vpop.xlane.xlu0 %700
    %702 = vadd.xlane.f32.xlu0 %v62
    %v703 = vpop.xlane.xlu0 %702
    %704 = vadd.xlane.f32.xlu0 %v63
    %v705 = vpop.xlane.xlu0 %704
    %706 = vadd.xlane.f32.xlu0 %v64
    %v707 = vpop.xlane.xlu0 %706
    %708 = vadd.xlane.f32.xlu0 %v65
    %v709 = vpop.xlane.xlu0 %708
    %710 = vadd.xlane.f32.xlu0 %v66
    %v711 = vpop.xlane.xlu0 %710
    %712 = vadd.xlane.f32.xlu0 %v67
    %v713 = vpop.xlane.xlu0 %712
    %714 = vadd.xlane.f32.xlu0 %v68
    %v715 = vpop.xlane.xlu0 %714
    %716 = vadd.xlane.f32.xlu0 %v69
    %v717 = vpop.xlane.xlu0 %716
    %718 = vadd.xlane.f32.xlu0 %v70
    %v719 = vpop.xlane.xlu0 %718
    %720 = vadd.xlane.f32.xlu0 %v71
    %v721 = vpop.xlane.xlu0 %720
    %722 = vadd.xlane.f32.xlu0 %v72
    %v723 = vpop.xlane.xlu0 %722
    %724 = vadd.xlane.f32.xlu0 %v73
    %v725 = vpop.xlane.xlu0 %724
    %726 = vadd.xlane.f32.xlu0 %v74
    %v727 = vpop.xlane.xlu0 %726
    %728 = vadd.xlane.f32.xlu0 %v75
    %v729 = vpop.xlane.xlu0 %728
    %730 = vadd.xlane.f32.xlu0 %v76
    %v731 = vpop.xlane.xlu0 %730
    %v732 = vmul.f32 %v669, 0.015625
    %v733 = vmul.f32 %v671, 0.015625
    %v734 = vmul.f32 %v673, 0.015625
    %v735 = vmul.f32 %v675, 0.015625
    %v736 = vmul.f32 %v677, 0.015625
    %v737 = vmul.f32 %v679, 0.015625
    %v738 = vmul.f32 %v681, 0.015625
    %v739 = vmul.f32 %v683, 0.015625
    %v740 = vmul.f32 %v685, 0.015625
    %v741 = vmul.f32 %v687, 0.015625
    %v742 = vmul.f32 %v689, 0.015625
    %v743 = vmul.f32 %v691, 0.015625
    %v744 = vmul.f32 %v693, 0.015625
    %v745 = vmul.f32 %v695, 0.015625
    %v746 = vmul.f32 %v697, 0.015625
    %v747 = vmul.f32 %v699, 0.015625
    %v748 = vmul.f32 %v701, 0.015625
    %v749 = vmul.f32 %v703, 0.015625
    %v750 = vmul.f32 %v705, 0.015625
    %v751 = vmul.f32 %v707, 0.015625
    %v752 = vmul.f32 %v709, 0.015625
    %v753 = vmul.f32 %v711, 0.015625
    %v754 = vmul.f32 %v713, 0.015625
    %v755 = vmul.f32 %v715, 0.015625
    %v756 = vmul.f32 %v717, 0.015625
    %v757 = vmul.f32 %v719, 0.015625
    %v758 = vmul.f32 %v721, 0.015625
    %v759 = vmul.f32 %v723, 0.015625
    %v760 = vmul.f32 %v725, 0.015625
    %v761 = vmul.f32 %v727, 0.015625
    %v762 = vmul.f32 %v729, 0.015625
    %v763 = vmul.f32 %v731, 0.015625
    %v764 = vlaneseq
    %v765 = vand.u32 %v764, 127
    %vm766 = vcmp.lt.s32.totalorder %v765, 64
    %v767 = vsel %vm766, 1, 0
    %v768 = vcvt.s32.f32 %v767
    %v769 = vmul.f32 %v732, %v768
    %v770 = vmul.f32 %v733, %v768
    %v771 = vmul.f32 %v734, %v768
    %v772 = vmul.f32 %v735, %v768
    %v773 = vmul.f32 %v736, %v768
    %v774 = vmul.f32 %v737, %v768
    %v775 = vmul.f32 %v738, %v768
    %v776 = vmul.f32 %v739, %v768
    %v777 = vmul.f32 %v740, %v768
    %v778 = vmul.f32 %v741, %v768
    %v779 = vmul.f32 %v742, %v768
    %v780 = vmul.f32 %v743, %v768
    %v781 = vmul.f32 %v744, %v768
    %v782 = vmul.f32 %v745, %v768
    %v783 = vmul.f32 %v746, %v768
    %v784 = vmul.f32 %v747, %v768
    %v785 = vmul.f32 %v748, %v768
    %v786 = vmul.f32 %v749, %v768
    %v787 = vmul.f32 %v750, %v768
    %v788 = vmul.f32 %v751, %v768
    %v789 = vmul.f32 %v752, %v768
    %v790 = vmul.f32 %v753, %v768
    %v791 = vmul.f32 %v754, %v768
    %v792 = vmul.f32 %v755, %v768
    %v793 = vmul.f32 %v756, %v768
    %v794 = vmul.f32 %v757, %v768
    %v795 = vmul.f32 %v758, %v768
    %v796 = vmul.f32 %v759, %v768
    %v797 = vmul.f32 %v760, %v768
    %v798 = vmul.f32 %v761, %v768
    %v799 = vmul.f32 %v762, %v768
    %v800 = vmul.f32 %v763, %v768
    %v801 = vsub.f32 %v45, %v769
    %v802 = vsub.f32 %v46, %v770
    %v803 = vsub.f32 %v47, %v771
    %v804 = vsub.f32 %v48, %v772
    %v805 = vsub.f32 %v49, %v773
    %v806 = vsub.f32 %v50, %v774
    %v807 = vsub.f32 %v51, %v775
    %v808 = vsub.f32 %v52, %v776
    %v809 = vsub.f32 %v53, %v777
    %v810 = vsub.f32 %v54, %v778
    %v811 = vsub.f32 %v55, %v779
    %v812 = vsub.f32 %v56, %v780
    %v813 = vsub.f32 %v57, %v781
    %v814 = vsub.f32 %v58, %v782
    %v815 = vsub.f32 %v59, %v783
    %v816 = vsub.f32 %v60, %v784
    %v817 = vsub.f32 %v61, %v785
    %v818 = vsub.f32 %v62, %v786
    %v819 = vsub.f32 %v63, %v787
    %v820 = vsub.f32 %v64, %v788
    %v821 = vsub.f32 %v65, %v789
    %v822 = vsub.f32 %v66, %v790
    %v823 = vsub.f32 %v67, %v791
    %v824 = vsub.f32 %v68, %v792
    %v825 = vsub.f32 %v69, %v793
    %v826 = vsub.f32 %v70, %v794
    %v827 = vsub.f32 %v71, %v795
    %v828 = vsub.f32 %v72, %v796
    %v829 = vsub.f32 %v73, %v797
    %v830 = vsub.f32 %v74, %v798
    %v831 = vsub.f32 %v75, %v799
    %v832 = vsub.f32 %v76, %v800
    %v833 = vmul.f32 %v801, %v801
    %v834 = vmul.f32 %v802, %v802
    %v835 = vmul.f32 %v803, %v803
    %v836 = vmul.f32 %v804, %v804
    %v837 = vmul.f32 %v805, %v805
    %v838 = vmul.f32 %v806, %v806
    %v839 = vmul.f32 %v807, %v807
    %v840 = vmul.f32 %v808, %v808
    %v841 = vmul.f32 %v809, %v809
    %v842 = vmul.f32 %v810, %v810
    %v843 = vmul.f32 %v811, %v811
    %v844 = vmul.f32 %v812, %v812
    %v845 = vmul.f32 %v813, %v813
    %v846 = vmul.f32 %v814, %v814
    %v847 = vmul.f32 %v815, %v815
    %v848 = vmul.f32 %v816, %v816
    %v849 = vmul.f32 %v817, %v817
    %v850 = vmul.f32 %v818, %v818
    %v851 = vmul.f32 %v819, %v819
    %v852 = vmul.f32 %v820, %v820
    %v853 = vmul.f32 %v821, %v821
    %v854 = vmul.f32 %v822, %v822
    %v855 = vmul.f32 %v823, %v823
    %v856 = vmul.f32 %v824, %v824
    %v857 = vmul.f32 %v825, %v825
    %v858 = vmul.f32 %v826, %v826
    %v859 = vmul.f32 %v827, %v827
    %v860 = vmul.f32 %v828, %v828
    %v861 = vmul.f32 %v829, %v829
    %v862 = vmul.f32 %v830, %v830
    %v863 = vmul.f32 %v831, %v831
    %v864 = vmul.f32 %v832, %v832
    %865 = vadd.xlane.f32.xlu0 %v833
    %v866 = vpop.xlane.xlu0 %865
    %867 = vadd.xlane.f32.xlu0 %v834
    %v868 = vpop.xlane.xlu0 %867
    %869 = vadd.xlane.f32.xlu0 %v835
    %v870 = vpop.xlane.xlu0 %869
    %871 = vadd.xlane.f32.xlu0 %v836
    %v872 = vpop.xlane.xlu0 %871
    %873 = vadd.xlane.f32.xlu0 %v837
    %v874 = vpop.xlane.xlu0 %873
    %875 = vadd.xlane.f32.xlu0 %v838
    %v876 = vpop.xlane.xlu0 %875
    %877 = vadd.xlane.f32.xlu0 %v839
    %v878 = vpop.xlane.xlu0 %877
    %879 = vadd.xlane.f32.xlu0 %v840
    %v880 = vpop.xlane.xlu0 %879
    %881 = vadd.xlane.f32.xlu0 %v841
    %v882 = vpop.xlane.xlu0 %881
    %883 = vadd.xlane.f32.xlu0 %v842
    %v884 = vpop.xlane.xlu0 %883
    %885 = vadd.xlane.f32.xlu0 %v843
    %v886 = vpop.xlane.xlu0 %885
    %887 = vadd.xlane.f32.xlu0 %v844
    %v888 = vpop.xlane.xlu0 %887
    %889 = vadd.xlane.f32.xlu0 %v845
    %v890 = vpop.xlane.xlu0 %889
    %891 = vadd.xlane.f32.xlu0 %v846
    %v892 = vpop.xlane.xlu0 %891
    %893 = vadd.xlane.f32.xlu0 %v847
    %v894 = vpop.xlane.xlu0 %893
    %895 = vadd.xlane.f32.xlu0 %v848
    %v896 = vpop.xlane.xlu0 %895
    %897 = vadd.xlane.f32.xlu0 %v849
    %v898 = vpop.xlane.xlu0 %897
    %899 = vadd.xlane.f32.xlu0 %v850
    %v900 = vpop.xlane.xlu0 %899
    %901 = vadd.xlane.f32.xlu0 %v851
    %v902 = vpop.xlane.xlu0 %901
    %903 = vadd.xlane.f32.xlu0 %v852
    %v904 = vpop.xlane.xlu0 %903
    %905 = vadd.xlane.f32.xlu0 %v853
    %v906 = vpop.xlane.xlu0 %905
    %907 = vadd.xlane.f32.xlu0 %v854
    %v908 = vpop.xlane.xlu0 %907
    %909 = vadd.xlane.f32.xlu0 %v855
    %v910 = vpop.xlane.xlu0 %909
    %911 = vadd.xlane.f32.xlu0 %v856
    %v912 = vpop.xlane.xlu0 %911
    %913 = vadd.xlane.f32.xlu0 %v857
    %v914 = vpop.xlane.xlu0 %913
    %915 = vadd.xlane.f32.xlu0 %v858
    %v916 = vpop.xlane.xlu0 %915
    %917 = vadd.xlane.f32.xlu0 %v859
    %v918 = vpop.xlane.xlu0 %917
    %919 = vadd.xlane.f32.xlu0 %v860
    %v920 = vpop.xlane.xlu0 %919
    %921 = vadd.xlane.f32.xlu0 %v861
    %v922 = vpop.xlane.xlu0 %921
    %923 = vadd.xlane.f32.xlu0 %v862
    %v924 = vpop.xlane.xlu0 %923
    %925 = vadd.xlane.f32.xlu0 %v863
    %v926 = vpop.xlane.xlu0 %925
    %927 = vadd.xlane.f32.xlu0 %v864
    %v928 = vpop.xlane.xlu0 %927
    %v929 = vrsqrt.pop %v866
    %v930 = vmul.f32 %v866, %v929
    %vm931 = vcmp.eq.f32.partialorder %v866, inf
    %v932 = vsel %vm931, %v866, %v930
    %vm933 = vcmp.eq.f32.partialorder %v866, 0.0
    %v934 = vand.u32 %v866, 2147483648
    %v935 = vsel %vm933, %v934, %v932
    %v936 = vrsqrt.pop %v868
    %v937 = vmul.f32 %v868, %v936
    %vm938 = vcmp.eq.f32.partialorder %v868, inf
    %v939 = vsel %vm938, %v868, %v937
    %vm940 = vcmp.eq.f32.partialorder %v868, 0.0
    %v941 = vand.u32 %v868, 2147483648
    %v942 = vsel %vm940, %v941, %v939
    %v943 = vrsqrt.pop %v870
    %v944 = vmul.f32 %v870, %v943
    %vm945 = vcmp.eq.f32.partialorder %v870, inf
    %v946 = vsel %vm945, %v870, %v944
    %vm947 = vcmp.eq.f32.partialorder %v870, 0.0
    %v948 = vand.u32 %v870, 2147483648
    %v949 = vsel %vm947, %v948, %v946
    %v950 = vrsqrt.pop %v872
    %v951 = vmul.f32 %v872, %v950
    %vm952 = vcmp.eq.f32.partialorder %v872, inf
    %v953 = vsel %vm952, %v872, %v951
    %vm954 = vcmp.eq.f32.partialorder %v872, 0.0
    %v955 = vand.u32 %v872, 2147483648
    %v956 = vsel %vm954, %v955, %v953
    %v957 = vrsqrt.pop %v874
    %v958 = vmul.f32 %v874, %v957
    %vm959 = vcmp.eq.f32.partialorder %v874, inf
    %v960 = vsel %vm959, %v874, %v958
    %vm961 = vcmp.eq.f32.partialorder %v874, 0.0
    %v962 = vand.u32 %v874, 2147483648
    %v963 = vsel %vm961, %v962, %v960
    %v964 = vrsqrt.pop %v876
    %v965 = vmul.f32 %v876, %v964
    %vm966 = vcmp.eq.f32.partialorder %v876, inf
    %v967 = vsel %vm966, %v876, %v965
    %vm968 = vcmp.eq.f32.partialorder %v876, 0.0
    %v969 = vand.u32 %v876, 2147483648
    %v970 = vsel %vm968, %v969, %v967
    %v971 = vrsqrt.pop %v878
    %v972 = vmul.f32 %v878, %v971
    %vm973 = vcmp.eq.f32.partialorder %v878, inf
    %v974 = vsel %vm973, %v878, %v972
    %vm975 = vcmp.eq.f32.partialorder %v878, 0.0
    %v976 = vand.u32 %v878, 2147483648
    %v977 = vsel %vm975, %v976, %v974
    %v978 = vrsqrt.pop %v880
    %v979 = vmul.f32 %v880, %v978
    %vm980 = vcmp.eq.f32.partialorder %v880, inf
    %v981 = vsel %vm980, %v880, %v979
    %vm982 = vcmp.eq.f32.partialorder %v880, 0.0
    %v983 = vand.u32 %v880, 2147483648
    %v984 = vsel %vm982, %v983, %v981
    %v985 = vrsqrt.pop %v882
    %v986 = vmul.f32 %v882, %v985
    %vm987 = vcmp.eq.f32.partialorder %v882, inf
    %v988 = vsel %vm987, %v882, %v986
    %vm989 = vcmp.eq.f32.partialorder %v882, 0.0
    %v990 = vand.u32 %v882, 2147483648
    %v991 = vsel %vm989, %v990, %v988
    %v992 = vrsqrt.pop %v884
    %v993 = vmul.f32 %v884, %v992
    %vm994 = vcmp.eq.f32.partialorder %v884, inf
    %v995 = vsel %vm994, %v884, %v993
    %vm996 = vcmp.eq.f32.partialorder %v884, 0.0
    %v997 = vand.u32 %v884, 2147483648
    %v998 = vsel %vm996, %v997, %v995
    %v999 = vrsqrt.pop %v886
    %v1000 = vmul.f32 %v886, %v999
    %vm1001 = vcmp.eq.f32.partialorder %v886, inf
    %v1002 = vsel %vm1001, %v886, %v1000
    %vm1003 = vcmp.eq.f32.partialorder %v886, 0.0
    %v1004 = vand.u32 %v886, 2147483648
    %v1005 = vsel %vm1003, %v1004, %v1002
    %v1006 = vrsqrt.pop %v888
    %v1007 = vmul.f32 %v888, %v1006
    %vm1008 = vcmp.eq.f32.partialorder %v888, inf
    %v1009 = vsel %vm1008, %v888, %v1007
    %vm1010 = vcmp.eq.f32.partialorder %v888, 0.0
    %v1011 = vand.u32 %v888, 2147483648
    %v1012 = vsel %vm1010, %v1011, %v1009
    %v1013 = vrsqrt.pop %v890
    %v1014 = vmul.f32 %v890, %v1013
    %vm1015 = vcmp.eq.f32.partialorder %v890, inf
    %v1016 = vsel %vm1015, %v890, %v1014
    %vm1017 = vcmp.eq.f32.partialorder %v890, 0.0
    %v1018 = vand.u32 %v890, 2147483648
    %v1019 = vsel %vm1017, %v1018, %v1016
    %v1020 = vrsqrt.pop %v892
    %v1021 = vmul.f32 %v892, %v1020
    %vm1022 = vcmp.eq.f32.partialorder %v892, inf
    %v1023 = vsel %vm1022, %v892, %v1021
    %vm1024 = vcmp.eq.f32.partialorder %v892, 0.0
    %v1025 = vand.u32 %v892, 2147483648
    %v1026 = vsel %vm1024, %v1025, %v1023
    %v1027 = vrsqrt.pop %v894
    %v1028 = vmul.f32 %v894, %v1027
    %vm1029 = vcmp.eq.f32.partialorder %v894, inf
    %v1030 = vsel %vm1029, %v894, %v1028
    %vm1031 = vcmp.eq.f32.partialorder %v894, 0.0
    %v1032 = vand.u32 %v894, 2147483648
    %v1033 = vsel %vm1031, %v1032, %v1030
    %v1034 = vrsqrt.pop %v896
    %v1035 = vmul.f32 %v896, %v1034
    %vm1036 = vcmp.eq.f32.partialorder %v896, inf
    %v1037 = vsel %vm1036, %v896, %v1035
    %vm1038 = vcmp.eq.f32.partialorder %v896, 0.0
    %v1039 = vand.u32 %v896, 2147483648
    %v1040 = vsel %vm1038, %v1039, %v1037
    %v1041 = vrsqrt.pop %v898
    %v1042 = vmul.f32 %v898, %v1041
    %vm1043 = vcmp.eq.f32.partialorder %v898, inf
    %v1044 = vsel %vm1043, %v898, %v1042
    %vm1045 = vcmp.eq.f32.partialorder %v898, 0.0
    %v1046 = vand.u32 %v898, 2147483648
    %v1047 = vsel %vm1045, %v1046, %v1044
    %v1048 = vrsqrt.pop %v900
    %v1049 = vmul.f32 %v900, %v1048
    %vm1050 = vcmp.eq.f32.partialorder %v900, inf
    %v1051 = vsel %vm1050, %v900, %v1049
    %vm1052 = vcmp.eq.f32.partialorder %v900, 0.0
    %v1053 = vand.u32 %v900, 2147483648
    %v1054 = vsel %vm1052, %v1053, %v1051
    %v1055 = vrsqrt.pop %v902
    %v1056 = vmul.f32 %v902, %v1055
    %vm1057 = vcmp.eq.f32.partialorder %v902, inf
    %v1058 = vsel %vm1057, %v902, %v1056
    %vm1059 = vcmp.eq.f32.partialorder %v902, 0.0
    %v1060 = vand.u32 %v902, 2147483648
    %v1061 = vsel %vm1059, %v1060, %v1058
    %v1062 = vrsqrt.pop %v904
    %v1063 = vmul.f32 %v904, %v1062
    %vm1064 = vcmp.eq.f32.partialorder %v904, inf
    %v1065 = vsel %vm1064, %v904, %v1063
    %vm1066 = vcmp.eq.f32.partialorder %v904, 0.0
    %v1067 = vand.u32 %v904, 2147483648
    %v1068 = vsel %vm1066, %v1067, %v1065
    %v1069 = vrsqrt.pop %v906
    %v1070 = vmul.f32 %v906, %v1069
    %vm1071 = vcmp.eq.f32.partialorder %v906, inf
    %v1072 = vsel %vm1071, %v906, %v1070
    %vm1073 = vcmp.eq.f32.partialorder %v906, 0.0
    %v1074 = vand.u32 %v906, 2147483648
    %v1075 = vsel %vm1073, %v1074, %v1072
    %v1076 = vrsqrt.pop %v908
    %v1077 = vmul.f32 %v908, %v1076
    %vm1078 = vcmp.eq.f32.partialorder %v908, inf
    %v1079 = vsel %vm1078, %v908, %v1077
    %vm1080 = vcmp.eq.f32.partialorder %v908, 0.0
    %v1081 = vand.u32 %v908, 2147483648
    %v1082 = vsel %vm1080, %v1081, %v1079
    %v1083 = vrsqrt.pop %v910
    %v1084 = vmul.f32 %v910, %v1083
    %vm1085 = vcmp.eq.f32.partialorder %v910, inf
    %v1086 = vsel %vm1085, %v910, %v1084
    %vm1087 = vcmp.eq.f32.partialorder %v910, 0.0
    %v1088 = vand.u32 %v910, 2147483648
    %v1089 = vsel %vm1087, %v1088, %v1086
    %v1090 = vrsqrt.pop %v912
    %v1091 = vmul.f32 %v912, %v1090
    %vm1092 = vcmp.eq.f32.partialorder %v912, inf
    %v1093 = vsel %vm1092, %v912, %v1091
    %vm1094 = vcmp.eq.f32.partialorder %v912, 0.0
    %v1095 = vand.u32 %v912, 2147483648
    %v1096 = vsel %vm1094, %v1095, %v1093
    %v1097 = vrsqrt.pop %v914
    %v1098 = vmul.f32 %v914, %v1097
    %vm1099 = vcmp.eq.f32.partialorder %v914, inf
    %v1100 = vsel %vm1099, %v914, %v1098
    %vm1101 = vcmp.eq.f32.partialorder %v914, 0.0
    %v1102 = vand.u32 %v914, 2147483648
    %v1103 = vsel %vm1101, %v1102, %v1100
    %v1104 = vrsqrt.pop %v916
    %v1105 = vmul.f32 %v916, %v1104
    %vm1106 = vcmp.eq.f32.partialorder %v916, inf
    %v1107 = vsel %vm1106, %v916, %v1105
    %vm1108 = vcmp.eq.f32.partialorder %v916, 0.0
    %v1109 = vand.u32 %v916, 2147483648
    %v1110 = vsel %vm1108, %v1109, %v1107
    %v1111 = vrsqrt.pop %v918
    %v1112 = vmul.f32 %v918, %v1111
    %vm1113 = vcmp.eq.f32.partialorder %v918, inf
    %v1114 = vsel %vm1113, %v918, %v1112
    %vm1115 = vcmp.eq.f32.partialorder %v918, 0.0
    %v1116 = vand.u32 %v918, 2147483648
    %v1117 = vsel %vm1115, %v1116, %v1114
    %v1118 = vrsqrt.pop %v920
    %v1119 = vmul.f32 %v920, %v1118
    %vm1120 = vcmp.eq.f32.partialorder %v920, inf
    %v1121 = vsel %vm1120, %v920, %v1119
    %vm1122 = vcmp.eq.f32.partialorder %v920, 0.0
    %v1123 = vand.u32 %v920, 2147483648
    %v1124 = vsel %vm1122, %v1123, %v1121
    %v1125 = vrsqrt.pop %v922
    %v1126 = vmul.f32 %v922, %v1125
    %vm1127 = vcmp.eq.f32.partialorder %v922, inf
    %v1128 = vsel %vm1127, %v922, %v1126
    %vm1129 = vcmp.eq.f32.partialorder %v922, 0.0
    %v1130 = vand.u32 %v922, 2147483648
    %v1131 = vsel %vm1129, %v1130, %v1128
    %v1132 = vrsqrt.pop %v924
    %v1133 = vmul.f32 %v924, %v1132
    %vm1134 = vcmp.eq.f32.partialorder %v924, inf
    %v1135 = vsel %vm1134, %v924, %v1133
    %vm1136 = vcmp.eq.f32.partialorder %v924, 0.0
    %v1137 = vand.u32 %v924, 2147483648
    %v1138 = vsel %vm1136, %v1137, %v1135
    %v1139 = vrsqrt.pop %v926
    %v1140 = vmul.f32 %v926, %v1139
    %vm1141 = vcmp.eq.f32.partialorder %v926, inf
    %v1142 = vsel %vm1141, %v926, %v1140
    %vm1143 = vcmp.eq.f32.partialorder %v926, 0.0
    %v1144 = vand.u32 %v926, 2147483648
    %v1145 = vsel %vm1143, %v1144, %v1142
    %v1146 = vrsqrt.pop %v928
    %v1147 = vmul.f32 %v928, %v1146
    %vm1148 = vcmp.eq.f32.partialorder %v928, inf
    %v1149 = vsel %vm1148, %v928, %v1147
    %vm1150 = vcmp.eq.f32.partialorder %v928, 0.0
    %v1151 = vand.u32 %v928, 2147483648
    %v1152 = vsel %vm1150, %v1151, %v1149
    %v1153 = vmax.f32 %v935, 1e-08
    %v1154 = vmax.f32 %v942, 1e-08
    %v1155 = vmax.f32 %v949, 1e-08
    %v1156 = vmax.f32 %v956, 1e-08
    %v1157 = vmax.f32 %v963, 1e-08
    %v1158 = vmax.f32 %v970, 1e-08
    %v1159 = vmax.f32 %v977, 1e-08
    %v1160 = vmax.f32 %v984, 1e-08
    %v1161 = vmax.f32 %v991, 1e-08
    %v1162 = vmax.f32 %v998, 1e-08
    %v1163 = vmax.f32 %v1005, 1e-08
    %v1164 = vmax.f32 %v1012, 1e-08
    %v1165 = vmax.f32 %v1019, 1e-08
    %v1166 = vmax.f32 %v1026, 1e-08
    %v1167 = vmax.f32 %v1033, 1e-08
    %v1168 = vmax.f32 %v1040, 1e-08
    %v1169 = vmax.f32 %v1047, 1e-08
    %v1170 = vmax.f32 %v1054, 1e-08
    %v1171 = vmax.f32 %v1061, 1e-08
    %v1172 = vmax.f32 %v1068, 1e-08
    %v1173 = vmax.f32 %v1075, 1e-08
    %v1174 = vmax.f32 %v1082, 1e-08
    %v1175 = vmax.f32 %v1089, 1e-08
    %v1176 = vmax.f32 %v1096, 1e-08
    %v1177 = vmax.f32 %v1103, 1e-08
    %v1178 = vmax.f32 %v1110, 1e-08
    %v1179 = vmax.f32 %v1117, 1e-08
    %v1180 = vmax.f32 %v1124, 1e-08
    %v1181 = vmax.f32 %v1131, 1e-08
    %v1182 = vmax.f32 %v1138, 1e-08
    %v1183 = vmax.f32 %v1145, 1e-08
    %v1184 = vmax.f32 %v1152, 1e-08
    %v1185 = vrcp.pop %v1153
    %v1186 = vrcp.pop %v1154
    %v1187 = vrcp.pop %v1155
    %v1188 = vrcp.pop %v1156
    %v1189 = vrcp.pop %v1157
    %v1190 = vrcp.pop %v1158
    %v1191 = vrcp.pop %v1159
    %v1192 = vrcp.pop %v1160
    %v1193 = vrcp.pop %v1161
    %v1194 = vrcp.pop %v1162
    %v1195 = vrcp.pop %v1163
    %v1196 = vrcp.pop %v1164
    %v1197 = vrcp.pop %v1165
    %v1198 = vrcp.pop %v1166
    %v1199 = vrcp.pop %v1167
    %v1200 = vrcp.pop %v1168
    %v1201 = vrcp.pop %v1169
    %v1202 = vrcp.pop %v1170
    %v1203 = vrcp.pop %v1171
    %v1204 = vrcp.pop %v1172
    %v1205 = vrcp.pop %v1173
    %v1206 = vrcp.pop %v1174
    %v1207 = vrcp.pop %v1175
    %v1208 = vrcp.pop %v1176
    %v1209 = vrcp.pop %v1177
    %v1210 = vrcp.pop %v1178
    %v1211 = vrcp.pop %v1179
    %v1212 = vrcp.pop %v1180
    %v1213 = vrcp.pop %v1181
    %v1214 = vrcp.pop %v1182
    %v1215 = vrcp.pop %v1183
    %v1216 = vrcp.pop %v1184
    %v1217 = vmul.f32 %v801, %v1185
    %v1218 = vmul.f32 %v802, %v1186
    %v1219 = vmul.f32 %v803, %v1187
    %v1220 = vmul.f32 %v804, %v1188
    %v1221 = vmul.f32 %v805, %v1189
    %v1222 = vmul.f32 %v806, %v1190
    %v1223 = vmul.f32 %v807, %v1191
    %v1224 = vmul.f32 %v808, %v1192
    %v1225 = vmul.f32 %v809, %v1193
    %v1226 = vmul.f32 %v810, %v1194
    %v1227 = vmul.f32 %v811, %v1195
    %v1228 = vmul.f32 %v812, %v1196
    %v1229 = vmul.f32 %v813, %v1197
    %v1230 = vmul.f32 %v814, %v1198
    %v1231 = vmul.f32 %v815, %v1199
    %v1232 = vmul.f32 %v816, %v1200
    %v1233 = vmul.f32 %v817, %v1201
    %v1234 = vmul.f32 %v818, %v1202
    %v1235 = vmul.f32 %v819, %v1203
    %v1236 = vmul.f32 %v820, %v1204
    %v1237 = vmul.f32 %v821, %v1205
    %v1238 = vmul.f32 %v822, %v1206
    %v1239 = vmul.f32 %v823, %v1207
    %v1240 = vmul.f32 %v824, %v1208
    %v1241 = vmul.f32 %v825, %v1209
    %v1242 = vmul.f32 %v826, %v1210
    %v1243 = vmul.f32 %v827, %v1211
    %v1244 = vmul.f32 %v828, %v1212
    %v1245 = vmul.f32 %v829, %v1213
    %v1246 = vmul.f32 %v830, %v1214
    %v1247 = vmul.f32 %v831, %v1215
    %v1248 = vmul.f32 %v832, %v1216
    %v1249 = vpack.c.bf16 %v1218, %v1217
    %v1250 = vpack.c.bf16 %v1220, %v1219
    %v1251 = vpack.c.bf16 %v1222, %v1221
    %v1252 = vpack.c.bf16 %v1224, %v1223
    %v1253 = vpack.c.bf16 %v1226, %v1225
    %v1254 = vpack.c.bf16 %v1228, %v1227
    %v1255 = vpack.c.bf16 %v1230, %v1229
    %v1256 = vpack.c.bf16 %v1232, %v1231
    %v1257 = vpack.c.bf16 %v1234, %v1233
    %v1258 = vpack.c.bf16 %v1236, %v1235
    %v1259 = vpack.c.bf16 %v1238, %v1237
    %v1260 = vpack.c.bf16 %v1240, %v1239
    %v1261 = vpack.c.bf16 %v1242, %v1241
    %v1262 = vpack.c.bf16 %v1244, %v1243
    %v1263 = vpack.c.bf16 %v1246, %v1245
    %v1264 = vpack.c.bf16 %v1248, %v1247
    %1265 = vxpose.xlu0.c.b16.start [1/8] %v1249, 128
    %1266 = vxpose.xlu0.c.b16.cont [2/8] %v1250, 128
    %1267 = vxpose.xlu0.c.b16.cont [3/8] %v1251, 128
    %1268 = vxpose.xlu0.c.b16.cont [4/8] %v1252, 128
    %1269 = vxpose.xlu0.c.b16.cont [5/8] %v1253, 128
    %1270 = vxpose.xlu0.c.b16.cont [6/8] %v1254, 128
    %1271 = vxpose.xlu0.c.b16.cont [7/8] %v1255, 128
    %1272 = vxpose.xlu0.c.b16.end [8/8] %v1256, 128
    %v1273 = vpop.trf.xlu0
    %v1274 = vpop.trf.xlu0
    %v1275 = vpop.trf.xlu0
    %v1276 = vpop.trf.xlu0
    %v1277 = vpop.trf.xlu0
    %v1278 = vpop.trf.xlu0
    %v1279 = vpop.trf.xlu0
    %v1280 = vpop.trf.xlu0
    %1281 = vxpose.xlu0.c.b16.start [1/8] %v1257, 128
    %1282 = vxpose.xlu0.c.b16.cont [2/8] %v1258, 128
    %1283 = vxpose.xlu0.c.b16.cont [3/8] %v1259, 128
    %1284 = vxpose.xlu0.c.b16.cont [4/8] %v1260, 128
    %1285 = vxpose.xlu0.c.b16.cont [5/8] %v1261, 128
    %1286 = vxpose.xlu0.c.b16.cont [6/8] %v1262, 128
    %1287 = vxpose.xlu0.c.b16.cont [7/8] %v1263, 128
    %1288 = vxpose.xlu0.c.b16.end [8/8] %v1264, 128
    %v1289 = vpop.trf.xlu0
    %v1290 = vpop.trf.xlu0
    %v1291 = vpop.trf.xlu0
    %v1292 = vpop.trf.xlu0
    %v1293 = vpop.trf.xlu0
    %v1294 = vpop.trf.xlu0
    %v1295 = vpop.trf.xlu0
    %v1296 = vpop.trf.xlu0
    %v1313 = vunpack.c.l.b16 %v1273
    %v1314 = vunpack.c.l.b16 %v1289
    %v1315 = vunpack.c.h.b16 %v1273
    %v1316 = vunpack.c.h.b16 %v1289
    %v1317 = vunpack.c.l.b16 %v1274
    %v1318 = vunpack.c.l.b16 %v1290
    %v1319 = vunpack.c.h.b16 %v1274
    %v1320 = vunpack.c.h.b16 %v1290
    %v1321 = vunpack.c.l.b16 %v1275
    %v1322 = vunpack.c.l.b16 %v1291
    %v1323 = vunpack.c.h.b16 %v1275
    %v1324 = vunpack.c.h.b16 %v1291
    %v1325 = vunpack.c.l.b16 %v1276
    %v1326 = vunpack.c.l.b16 %v1292
    %v1327 = vunpack.c.h.b16 %v1276
    %v1328 = vunpack.c.h.b16 %v1292
    %v1329 = vunpack.c.l.b16 %v1277
    %v1330 = vunpack.c.l.b16 %v1293
    %v1331 = vunpack.c.h.b16 %v1277
    %v1332 = vunpack.c.h.b16 %v1293
    %v1333 = vunpack.c.l.b16 %v1278
    %v1334 = vunpack.c.l.b16 %v1294
    %v1335 = vunpack.c.h.b16 %v1278
    %v1336 = vunpack.c.h.b16 %v1294
    %v1337 = vunpack.c.l.b16 %v1279
    %v1338 = vunpack.c.l.b16 %v1295
    %v1339 = vunpack.c.h.b16 %v1279
    %v1340 = vunpack.c.h.b16 %v1295
    %v1341 = vunpack.c.l.b16 %v1280
    %v1342 = vunpack.c.l.b16 %v1296
    %v1343 = vunpack.c.h.b16 %v1280
    %v1344 = vunpack.c.h.b16 %v1296
    %v1345 = vpack.c.b16 %v1314, %v1313
    %v1346 = vpack.c.b16 %v1316, %v1315
    %v1347 = vpack.c.b16 %v1318, %v1317
    %v1348 = vpack.c.b16 %v1320, %v1319
    %v1349 = vpack.c.b16 %v1322, %v1321
    %v1350 = vpack.c.b16 %v1324, %v1323
    %v1351 = vpack.c.b16 %v1326, %v1325
    %v1352 = vpack.c.b16 %v1328, %v1327
    %v1353 = vpack.c.b16 %v1330, %v1329
    %v1354 = vpack.c.b16 %v1332, %v1331
    %v1355 = vpack.c.b16 %v1334, %v1333
    %v1356 = vpack.c.b16 %v1336, %v1335
    %v1357 = vpack.c.b16 %v1338, %v1337
    %v1358 = vpack.c.b16 %v1340, %v1339
    %v1359 = vpack.c.b16 %v1342, %v1341
    %v1360 = vpack.c.b16 %v1344, %v1343
    %1377 = vst [vmem:[#allocation8] sm:$0xff] %v1345
    %1378 = vst [vmem:[#allocation8 + $0x8] sm:$0xff] %v1346
    %1379 = vst [vmem:[#allocation8 + $0x10] sm:$0xff] %v1347
    %1380 = vst [vmem:[#allocation8 + $0x18] sm:$0xff] %v1348
    %1381 = vst [vmem:[#allocation8 + $0x20] sm:$0xff] %v1349
    %1382 = vst [vmem:[#allocation8 + $0x28] sm:$0xff] %v1350
    %1383 = vst [vmem:[#allocation8 + $0x30] sm:$0xff] %v1351
    %1384 = vst [vmem:[#allocation8 + $0x38] sm:$0xff] %v1352
    %1385 = vst [vmem:[#allocation8 + $0x40] sm:$0xff] %v1353
    %1386 = vst [vmem:[#allocation8 + $0x48] sm:$0xff] %v1354
    %1387 = vst [vmem:[#allocation8 + $0x50] sm:$0xff] %v1355
    %1388 = vst [vmem:[#allocation8 + $0x58] sm:$0xff] %v1356
    %1389 = vst [vmem:[#allocation8 + $0x60] sm:$0xff] %v1357
    %1390 = vst [vmem:[#allocation8 + $0x68] sm:$0xff] %v1358
    %1391 = vst [vmem:[#allocation8 + $0x70] sm:$0xff] %v1359
    %1392 = vst [vmem:[#allocation8 + $0x78] sm:$0xff] %v1360
    // Predicated region
    $region18: #{tpu_custom_call.1} parent=1 // pred_check
      _
    $region19: #{tpu_custom_call.1} parent=1 // pred_check_branch
      %1394 = sbr.rel (0) target = $region21
    $region20: #{tpu_custom_call.1} parent=1 // pred_region
      %s1396 = ssub.s32 1024, 1024
      %1397 = vsyncadd [#allocation4], %s1396
      %s1398 = sshll.u32 [#allocation7], 4
      %s1399 = int_to_ptr.vmem [resolvable:$true] %s1398
      %1404 = dma.vmem_to_hbm [thread:$0]  %s1399, 1024, %s2, [#allocation4], 64, 64, 4
    $region21: #{tpu_custom_call.1} parent=1 // pred_fallthru
      _
    // Predicated region
    $region22: #{tpu_custom_call.1} parent=1 // pred_check
      _
    $region23: #{tpu_custom_call.1} parent=1 // pred_check_branch
      %1406 = sbr.rel (0) target = $region25
    $region24: #{tpu_custom_call.1} parent=1 // pred_region
      %s1408 = ssub.s32 2048, 2048
      %1409 = vsyncadd [#allocation9], %s1408
      %s1410 = sshll.u32 [#allocation8], 4
      %s1411 = int_to_ptr.vmem [resolvable:$true] %s1410
      %1416 = dma.vmem_to_hbm [thread:$0]  %s1411, 2048, %s3, [#allocation9], 128, 128, 8
    $region25: #{tpu_custom_call.1} parent=1 // pred_fallthru
      _
    // Predicated region
    $region26: #{tpu_custom_call.1} parent=1 // pred_check
      _
    $region27: #{tpu_custom_call.1} parent=1 // pred_check_branch
      %1418 = sbr.rel (0) target = $region29
    $region28: #{tpu_custom_call.1} parent=1 // pred_region
      %s1420 = ssub.s32 512, 512
      %1421 = vsyncadd [#allocation9], %s1420
      %s1422 = sshll.u32 [#allocation10], 4
      %s1423 = int_to_ptr.vmem [resolvable:$true] %s1422
      %1428 = dma.vmem_to_hbm [thread:$0]  %s1423, 512, %s4, [#allocation9], 256, 256, 16
    $region29: #{tpu_custom_call.1} parent=1 // pred_fallthru
      _
    // Predicated region
    $region30: #{tpu_custom_call.1} parent=1 // pred_check
      _
    $region31: #{tpu_custom_call.1} parent=1 // pred_check_branch
      %1430 = sbr.rel (0) target = $region33
    $region32: #{tpu_custom_call.1} parent=1 // pred_region
      %1431 = dma.done [#allocation4], 1024
    $region33: #{tpu_custom_call.1} parent=1 // pred_fallthru
      _
    // Predicated region
    $region34: #{tpu_custom_call.1} parent=1 // pred_check
      _
    $region35: #{tpu_custom_call.1} parent=1 // pred_check_branch
      %1433 = sbr.rel (0) target = $region37
    $region36: #{tpu_custom_call.1} parent=1 // pred_region
      %1434 = dma.done [#allocation9], 2048
    $region37: #{tpu_custom_call.1} parent=1 // pred_fallthru
      _
    // Predicated region
    $region38: #{tpu_custom_call.1} parent=1 // pred_check
      _
    $region39: #{tpu_custom_call.1} parent=1 // pred_check_branch
      %1436 = sbr.rel (0) target = $region41
    $region40: #{tpu_custom_call.1} parent=1 // pred_region
      %1437 = dma.done [#allocation9], 512
    $region41: #{tpu_custom_call.1} parent=1 // pred_fallthru
      _
    %1438 = vsyncpa [#allocation3], 1
    %1439 = vsyncpa [#allocation6], 1
    %1440 = vsyncpa [#allocation4], 1
    %1441 = vsyncpa [#allocation9], 1

</llo_original>
